<compile_context>
chip_gen: v7x
topology: tpu7x:2x2x1
jax: 0.10.0
libtpu: 0.0.40
codegen_flags: <defaults>
</compile_context>

<pallas_src>
import functools

import numpy as np

import jax
import jax.numpy as jnp
from jax import lax
from jax.experimental import pallas as pl


NEG_SLOPE = 0.2
_R_ROW_ALIGN = 16          # keep R-slab row offsets on bf16 sublane-tile bounds


# --------------------------------- kernel -----------------------------------

def _leaky_relu(x, neg_slope):
    return jnp.where(x >= 0.0, x, neg_slope * x)


def _sketch_encoder_kernel(s_ref, we_ref, wc_ref, r_ref, b_ref, out_ref, *,
                           stages, nh, lane_w, neg_slope):
    """Whole SketchEncoder forward for the sublane-folded batch.

    s_ref  : (N*H, W*Cin)              f32  original sketch, channel-fastest.
    we_ref : (W*Cin, n_stage*3*lane)   bf16 all embed kw-taps (pooling folded).
    wc_ref : (n_stage*lane, 3*lane)    bf16 per-stage stride-2 conv kw-taps.
    r_ref  : (R_rows, N*H)             bf16 row-combine matrices (kh taps, H
                                            zero-pad, H stride, i-level pooling;
                                            block-diagonal over the batch).
    b_ref  : (2*n_stage, lane)         f32  biases (embed, conv per stage).
    out_ref: (sum_i N*H_{i+1}, lane)   f32  all stage outputs, stacked rows.
    """
    s = s_ref[...].astype(jnp.bfloat16)
    # One wide MXU matmul computes the W/kw part of EVERY stage's embed.
    y_e = jnp.dot(s, we_ref[...], preferred_element_type=jnp.float32)
    y_e = y_e.astype(jnp.bfloat16)                     # (N*H, n_stage*3*lane)

    x = None
    for i, st in enumerate(stages):
        rows_e, rows_c = st["rows_e"], st["rows_c"]

        # embed_i(DownSample^i(sketch)): row combine (kh taps + pooling in R').
        e = None
        for kh in range(3):
            r = r_ref[st["re_off"][kh]:st["re_off"][kh] + rows_e, 0:nh]
            col = st["col_off"] + kh * lane_w
            d = jnp.dot(r, y_e[:, col:col + lane_w],
                        preferred_element_type=jnp.float32)
            e = d if e is None else e + d
        e = _leaky_relu(e + b_ref[2 * i:2 * i + 1, :], neg_slope)
        if x is not None:                               # embed(x_d) + x
            e = e + x

        # conv_i: stride-2 ConvBlock(c -> 2c): one wide matmul + row combine.
        yc = jnp.dot(e.astype(jnp.bfloat16),
                     wc_ref[i * lane_w:(i + 1) * lane_w, :],
                     preferred_element_type=jnp.float32)
        yc = yc.astype(jnp.bfloat16)                    # (rows_e, 3*lane)
        acc = None
        for kh in range(3):
            r = r_ref[st["rc_off"][kh]:st["rc_off"][kh] + rows_c, 0:rows_e]
            d = jnp.dot(r, yc[:, kh * lane_w:(kh + 1) * lane_w],
                        preferred_element_type=jnp.float32)
            acc = d if acc is None else acc + d
        x = _leaky_relu(acc + b_ref[2 * i + 1:2 * i + 2, :], neg_slope)

        out_ref[st["out_off"]:st["out_off"] + rows_c, :] = x


# ---------------------- host-side operand preparation ------------------------

def _align_up(v, a):
    return -(-v // a) * a


def _band_weight(w_hwio, w_in, stride):
    """(3,3,Cin,Cout) HWIO -> 3 banded (w_in*Cin, wo*Cout) matrices (per kh).

    N_kh[w*Cin + ci, wo*Cout + co] = w[kh, w - stride*wo + 1, ci, co]
    (zero outside the 3-tap band; encodes W zero-padding and W stride)."""
    _, _, c_in, c_out = w_hwio.shape
    wo_dim = w_in // stride
    mats = []
    for kh in range(3):
        m = np.zeros((w_in * c_in, wo_dim * c_out), np.float32)
        for kw in range(3):
            for wo in range(wo_dim):
                w = stride * wo + kw - 1
                if 0 <= w < w_in:
                    m[w * c_in:(w + 1) * c_in, wo * c_out:(wo + 1) * c_out] = \
                        w_hwio[kh, kw]
        mats.append(m)
    return mats


def _row_select(h_out, h_in, stride, kh):
    """R_kh[ho, h] = 1 iff h == stride*ho + kh - 1 (zero rows == H zero-pad)."""
    m = np.zeros((h_out, h_in), np.float32)
    for ho in range(h_out):
        h = stride * ho + kh - 1
        if 0 <= h < h_in:
            m[ho, h] = 1.0
    return m


def _pool_h(h):
    m = np.zeros((h // 2, h), np.float32)
    for r in range(h // 2):
        m[r, 2 * r] = 0.5
        m[r, 2 * r + 1] = 0.5
    return m


def _pool_w(w, cin):
    m = np.zeros((w * cin, (w // 2) * cin), np.float32)
    for wi in range(w):
        for c in range(cin):
            m[wi * cin + c, (wi // 2) * cin + c] = 0.5
    return m


def prepare_params(params, batch, in_channels, height, width):
    """One-time operand packing (load time, outside the forward)."""
    n_stage = len(params)
    n, cin = batch, in_channels
    assert height % (1 << n_stage) == 0 and width % (1 << n_stage) == 0, \
        "H and W must be divisible by 2**stage"

    eye_n = np.eye(n, dtype=np.float32)
    ph = np.eye(height, dtype=np.float32)          # i-level pooling along H
    pw = np.eye(width * cin, dtype=np.float32)     # i-level pooling along W

    r_entries, r_rows = [], 0

    def push_r(mat):
        nonlocal r_rows
        off = r_rows
        r_entries.append((off, mat))
        r_rows = off + _align_up(mat.shape[0], _R_ROW_ALIGN)
        return off

    we_blocks, wc_blocks, bias_rows, stages = [], [], [], []
    lane_w = None
    col_off, out_off = 0, 0
    hcur, wcur = height, width
    for p in params:
        ew = np.asarray(p["embed_w"], np.float32)    # (3,3,Cin,c)
        eb = np.asarray(p["embed_b"], np.float32)
        cw = np.asarray(p["conv_w"], np.float32)     # (3,3,c,2c)
        cb = np.asarray(p["conv_b"], np.float32)
        c = ew.shape[3]
        we_i = wcur * c                              # embed output lane width
        wc_i = (wcur // 2) * cw.shape[3]             # conv output lane width
        if lane_w is None:
            lane_w = we_i
        assert we_i == lane_w and wc_i == lane_w, (
            "slab packing assumes every stage's W_i*C_out is identical "
            f"(got {we_i}/{wc_i} vs {lane_w})")

        # embed: banded kw-tap weights at stage resolution, W pooling folded in.
        ne = [pw @ m for m in _band_weight(ew, wcur, 1)]    # 3 x (W*Cin, lane)
        we_blocks.append(np.concatenate(ne, axis=1))         # (W*Cin, 3*lane)
        # conv (stride 2): banded kw-tap weights.
        wc_blocks.append(np.concatenate(_band_weight(cw, wcur, 2), axis=1))

        # row-combine matrices (block-diag over the folded batch).
        re_off = tuple(
            push_r(np.kron(eye_n, _row_select(hcur, hcur, 1, kh) @ ph))
            for kh in range(3))
        rc_off = tuple(
            push_r(np.kron(eye_n, _row_select(hcur // 2, hcur, 2, kh)))
            for kh in range(3))

        bias_rows.append(np.tile(eb, wcur))
        bias_rows.append(np.tile(cb, wcur // 2))

        stages.append(dict(
            rows_e=n * hcur, rows_c=n * (hcur // 2),
            col_off=col_off, re_off=re_off, rc_off=rc_off, out_off=out_off,
            ho=hcur // 2, wo=wcur // 2, co=cw.shape[3]))
        col_off += 3 * we_i
        out_off += n * (hcur // 2)

        # next stage's embed reads the sketch pooled one more level.
        ph = _pool_h(hcur) @ ph
        pw = pw @ _pool_w(wcur, cin)
        hcur //= 2
        wcur //= 2

    r_all = np.zeros((_align_up(r_rows, _R_ROW_ALIGN), n * height), np.float32)
    for off, mat in r_entries:
        r_all[off:off + mat.shape[0], :mat.shape[1]] = mat

    inputs = (
        jnp.asarray(np.concatenate(we_blocks, axis=1), jnp.bfloat16),  # embed W
        jnp.asarray(np.concatenate(wc_blocks, axis=0), jnp.bfloat16),  # conv  W
        jnp.asarray(r_all, jnp.bfloat16),                              # R slab
        jnp.asarray(np.stack(bias_rows, axis=0), jnp.float32),         # biases
    )
    meta = dict(n=n, cin=cin, height=height, width=width, lane_w=lane_w,
                nh=n * height, out_rows=out_off, stages=tuple(stages))
    return dict(inputs=inputs, meta=meta)


# ------------------------------ forward wrapper ------------------------------

def sketch_encoder_forward(sketch_nchw, prepared):
    """Mirrors SketchEncoder.forward(); returns [sketch, x_0, ..., x_{S-1}]."""
    meta = prepared["meta"]
    n, cin, h, w = sketch_nchw.shape
    assert (n, cin, h, w) == (meta["n"], meta["cin"], meta["height"],
                              meta["width"]), \
        "operands were packed for a different input shape / batch"

    # NCHW -> channel-fastest dense layout with the batch folded into sublanes.
    s0 = jnp.transpose(sketch_nchw, (0, 2, 3, 1)).reshape(n * h, w * cin)

    kernel = functools.partial(
        _sketch_encoder_kernel, stages=meta["stages"], nh=meta["nh"],
        lane_w=meta["lane_w"], neg_slope=NEG_SLOPE)
    slab = pl.pallas_call(
        kernel,
        out_shape=jax.ShapeDtypeStruct((meta["out_rows"], meta["lane_w"]),
                                       jnp.float32),
    )(s0, *prepared["inputs"])

    outs = [sketch_nchw]
    for st in meta["stages"]:
        o = slab[st["out_off"]:st["out_off"] + st["rows_c"], :]
        o = o.reshape(n, st["ho"], st["wo"], st["co"])
        outs.append(jnp.transpose(o, (0, 3, 1, 2)))
    return outs


# ----------------------- plain-JAX reference (for check) ---------------------

def _ref_convblock(x, w, b, stride, neg_slope=NEG_SLOPE):
    y = lax.conv_general_dilated(
        x, w, window_strides=(stride, stride), padding=((1, 1), (1, 1)),
        dimension_numbers=("NCHW", "HWIO", "NCHW"),
        precision=lax.Precision.HIGHEST)
    y = y + b[None, :, None, None]
    return jnp.where(y >= 0.0, y, neg_slope * y)


def _ref_avgpool2x2(x):
    n, c, h, w = x.shape
    return x.reshape(n, c, h // 2, 2, w // 2, 2).mean(axis=(3, 5))


def reference_forward(sketch, params):
    outputs = [sketch]
    n_stage = len(params)
    x = None
    x_d = sketch
    for i, p in enumerate(params):
        src = sketch if i == 0 else x_d
        e = _ref_convblock(src, p["embed_w"], p["embed_b"], 1)
        if i > 0:
            e = e + x
        x = _ref_convblock(e, p["conv_w"], p["conv_b"], 2)
        outputs.append(x)
        if i == 0:
            x_d = _ref_avgpool2x2(sketch)
        elif i != n_stage - 1:
            x_d = _ref_avgpool2x2(x_d)
    return outputs


# ----------------------------------- setup -----------------------------------

def init_params(key, in_channels=1, c0=8, stage=3):
    """Deterministic parameter init (shapes match SketchEncoder.__init__)."""
    params = []
    c = c0
    for _ in range(stage):
        key, k1, k2, k3, k4 = jax.random.split(key, 5)
        params.append(dict(
            embed_w=jax.random.normal(k1, (3, 3, in_channels, c), jnp.float32)
                    * (9 * in_channels) ** -0.5,
            embed_b=jax.random.normal(k2, (c,), jnp.float32) * 0.1,
            conv_w=jax.random.normal(k3, (3, 3, c, 2 * c), jnp.float32)
                   * (9 * c) ** -0.5,
            conv_b=jax.random.normal(k4, (2 * c,), jnp.float32) * 0.1,
        ))
        c = 2 * c
    return params


if __name__ == "__main__":
    key = jax.random.PRNGKey(0)
    k_in, k_par = jax.random.split(key)

    # Small shapes consistent with the module: batch=2, in_channels=1,
    # spatial=16x16, c0 = config_encoder_init_channel = 8, stage = 3.
    N, Cin, H, W = 2, 1, 16, 16
    c0, stage = 8, 3

    sketch = jax.random.normal(k_in, (N, Cin, H, W), jnp.float32)
    params = init_params(k_par, in_channels=Cin, c0=c0, stage=stage)
    prepared = prepare_params(params, N, Cin, H, W)   # one-time operand packing

    fwd = jax.jit(lambda s: sketch_encoder_forward(s, prepared))
    outs = jax.block_until_ready(fwd(sketch))

    # Shape checks: [(2,1,16,16), (2,16,8,8), (2,32,4,4), (2,64,2,2)]
    expected = [(N, Cin, H, W)]
    c, s = c0, H
    for _ in range(stage):
        s //= 2
        expected.append((N, 2 * c, s, s))
        c *= 2
    assert [tuple(o.shape) for o in outs] == expected, \
        f"shape mismatch: {[tuple(o.shape) for o in outs]} vs {expected}"
    assert all(bool(jnp.isfinite(o).all()) for o in outs)

    # Numerical check vs a plain-JAX f32 reference (bf16 MXU operands in the
    # kernel -> absolute floor plus a relative term).
    refs = reference_forward(sketch, params)
    for o, r in zip(outs[1:], refs[1:]):
        err = float(jnp.max(jnp.abs(o - r)))
        tol = max(0.25, 0.02 * float(jnp.max(jnp.abs(r))))
        assert err < tol, f"max abs err {err} vs reference (tol {tol})"

    print("KERNEL_OK")
</pallas_src>

<mosaic_0001>
module attributes {stable_mosaic.version = 11 : i64} {
  func.func @_sketch_encoder_kernel(%arg0: memref<32x16xf32, #tpu.memory_space<vmem>>, %arg1: memref<16x1152xbf16, #tpu.memory_space<vmem>>, %arg2: memref<384x384xbf16, #tpu.memory_space<vmem>>, %arg3: memref<336x32xbf16, #tpu.memory_space<vmem>>, %arg4: memref<6x128xf32, #tpu.memory_space<vmem>>, %arg5: memref<28x128xf32, #tpu.memory_space<vmem>>) attributes {dimension_semantics = [], scalar_prefetch = 0 : i64, scratch_operands = 0 : i64, tpu.core_type = #tpu.core_type<tc>} {
    %c0 = arith.constant 0 : index
    %c0_0 = arith.constant 0 : index
    %0 = vector.load %arg0[%c0, %c0_0] : memref<32x16xf32, #tpu.memory_space<vmem>>, vector<32x16xf32>
    %1 = arith.truncf %0 : vector<32x16xf32> to vector<32x16xbf16>
    %c0_1 = arith.constant 0 : index
    %c0_2 = arith.constant 0 : index
    %2 = vector.load %arg1[%c0_1, %c0_2] : memref<16x1152xbf16, #tpu.memory_space<vmem>>, vector<16x1152xbf16>
    %cst = arith.constant dense<0.000000e+00> : vector<32x1152xf32>
    %3 = tpu.matmul %1, %2, %cst {dimension_numbers = #tpu.dot_dimension_numbers<[1], [0], [0], [1], [0, 0, 1, 1], [], []>} : vector<32x16xbf16>, vector<16x1152xbf16>, vector<32x1152xf32> -> vector<32x1152xf32>
    %4 = arith.truncf %3 : vector<32x1152xf32> to vector<32x1152xbf16>
    %c0_3 = arith.constant 0 : index
    %c0_4 = arith.constant 0 : index
    %5 = vector.load %arg3[%c0_3, %c0_4] : memref<336x32xbf16, #tpu.memory_space<vmem>>, vector<32x32xbf16>
    %6 = vector.extract_strided_slice %4 {offsets = [0, 0], sizes = [32, 128], strides = [1, 1]} : vector<32x1152xbf16> to vector<32x128xbf16>
    %cst_5 = arith.constant dense<0.000000e+00> : vector<32x128xf32>
    %7 = tpu.matmul %5, %6, %cst_5 {dimension_numbers = #tpu.dot_dimension_numbers<[1], [0], [0], [1], [0, 0, 1, 1], [], []>} : vector<32x32xbf16>, vector<32x128xbf16>, vector<32x128xf32> -> vector<32x128xf32>
    %c32 = arith.constant 32 : index
    %c0_6 = arith.constant 0 : index
    %8 = vector.load %arg3[%c32, %c0_6] : memref<336x32xbf16, #tpu.memory_space<vmem>>, vector<32x32xbf16>
    %9 = vector.extract_strided_slice %4 {offsets = [0, 128], sizes = [32, 128], strides = [1, 1]} : vector<32x1152xbf16> to vector<32x128xbf16>
    %cst_7 = arith.constant dense<0.000000e+00> : vector<32x128xf32>
    %10 = tpu.matmul %8, %9, %cst_7 {dimension_numbers = #tpu.dot_dimension_numbers<[1], [0], [0], [1], [0, 0, 1, 1], [], []>} : vector<32x32xbf16>, vector<32x128xbf16>, vector<32x128xf32> -> vector<32x128xf32>
    %11 = arith.addf %7, %10 : vector<32x128xf32>
    %c64 = arith.constant 64 : index
    %c0_8 = arith.constant 0 : index
    %12 = vector.load %arg3[%c64, %c0_8] : memref<336x32xbf16, #tpu.memory_space<vmem>>, vector<32x32xbf16>
    %13 = vector.extract_strided_slice %4 {offsets = [0, 256], sizes = [32, 128], strides = [1, 1]} : vector<32x1152xbf16> to vector<32x128xbf16>
    %cst_9 = arith.constant dense<0.000000e+00> : vector<32x128xf32>
    %14 = tpu.matmul %12, %13, %cst_9 {dimension_numbers = #tpu.dot_dimension_numbers<[1], [0], [0], [1], [0, 0, 1, 1], [], []>} : vector<32x32xbf16>, vector<32x128xbf16>, vector<32x128xf32> -> vector<32x128xf32>
    %15 = arith.addf %11, %14 : vector<32x128xf32>
    %c0_10 = arith.constant 0 : index
    %c0_11 = arith.constant 0 : index
    %16 = vector.load %arg4[%c0_10, %c0_11] : memref<6x128xf32, #tpu.memory_space<vmem>>, vector<1x128xf32>
    %17 = vector.broadcast %16 : vector<1x128xf32> to vector<32x128xf32>
    %18 = arith.addf %15, %17 : vector<32x128xf32>
    %cst_12 = arith.constant 0.000000e+00 : f32
    %19 = vector.broadcast %cst_12 : f32 to vector<32x128xf32>
    %20 = arith.cmpf oge, %18, %19 : vector<32x128xf32>
    %cst_13 = arith.constant 2.000000e-01 : f32
    %21 = vector.broadcast %cst_13 : f32 to vector<32x128xf32>
    %22 = arith.mulf %21, %18 : vector<32x128xf32>
    %23 = arith.select %20, %18, %22 : vector<32x128xi1>, vector<32x128xf32>
    %24 = arith.truncf %23 : vector<32x128xf32> to vector<32x128xbf16>
    %c0_14 = arith.constant 0 : index
    %c0_15 = arith.constant 0 : index
    %25 = vector.load %arg2[%c0_14, %c0_15] : memref<384x384xbf16, #tpu.memory_space<vmem>>, vector<128x384xbf16>
    %cst_16 = arith.constant dense<0.000000e+00> : vector<32x384xf32>
    %26 = tpu.matmul %24, %25, %cst_16 {dimension_numbers = #tpu.dot_dimension_numbers<[1], [0], [0], [1], [0, 0, 1, 1], [], []>} : vector<32x128xbf16>, vector<128x384xbf16>, vector<32x384xf32> -> vector<32x384xf32>
    %27 = arith.truncf %26 : vector<32x384xf32> to vector<32x384xbf16>
    %c96 = arith.constant 96 : index
    %c0_17 = arith.constant 0 : index
    %28 = vector.load %arg3[%c96, %c0_17] : memref<336x32xbf16, #tpu.memory_space<vmem>>, vector<16x32xbf16>
    %29 = vector.extract_strided_slice %27 {offsets = [0, 0], sizes = [32, 128], strides = [1, 1]} : vector<32x384xbf16> to vector<32x128xbf16>
    %cst_18 = arith.constant dense<0.000000e+00> : vector<16x128xf32>
    %30 = tpu.matmul %28, %29, %cst_18 {dimension_numbers = #tpu.dot_dimension_numbers<[1], [0], [0], [1], [0, 0, 1, 1], [], []>} : vector<16x32xbf16>, vector<32x128xbf16>, vector<16x128xf32> -> vector<16x128xf32>
    %c112 = arith.constant 112 : index
    %c0_19 = arith.constant 0 : index
    %31 = vector.load %arg3[%c112, %c0_19] : memref<336x32xbf16, #tpu.memory_space<vmem>>, vector<16x32xbf16>
    %32 = vector.extract_strided_slice %27 {offsets = [0, 128], sizes = [32, 128], strides = [1, 1]} : vector<32x384xbf16> to vector<32x128xbf16>
    %cst_20 = arith.constant dense<0.000000e+00> : vector<16x128xf32>
    %33 = tpu.matmul %31, %32, %cst_20 {dimension_numbers = #tpu.dot_dimension_numbers<[1], [0], [0], [1], [0, 0, 1, 1], [], []>} : vector<16x32xbf16>, vector<32x128xbf16>, vector<16x128xf32> -> vector<16x128xf32>
    %34 = arith.addf %30, %33 : vector<16x128xf32>
    %c128 = arith.constant 128 : index
    %c0_21 = arith.constant 0 : index
    %35 = vector.load %arg3[%c128, %c0_21] : memref<336x32xbf16, #tpu.memory_space<vmem>>, vector<16x32xbf16>
    %36 = vector.extract_strided_slice %27 {offsets = [0, 256], sizes = [32, 128], strides = [1, 1]} : vector<32x384xbf16> to vector<32x128xbf16>
    %cst_22 = arith.constant dense<0.000000e+00> : vector<16x128xf32>
    %37 = tpu.matmul %35, %36, %cst_22 {dimension_numbers = #tpu.dot_dimension_numbers<[1], [0], [0], [1], [0, 0, 1, 1], [], []>} : vector<16x32xbf16>, vector<32x128xbf16>, vector<16x128xf32> -> vector<16x128xf32>
    %38 = arith.addf %34, %37 : vector<16x128xf32>
    %c1 = arith.constant 1 : index
    %c0_23 = arith.constant 0 : index
    %39 = vector.load %arg4[%c1, %c0_23] : memref<6x128xf32, #tpu.memory_space<vmem>>, vector<1x128xf32>
    %40 = vector.broadcast %39 : vector<1x128xf32> to vector<16x128xf32>
    %41 = arith.addf %38, %40 : vector<16x128xf32>
    %cst_24 = arith.constant 0.000000e+00 : f32
    %42 = vector.broadcast %cst_24 : f32 to vector<16x128xf32>
    %43 = arith.cmpf oge, %41, %42 : vector<16x128xf32>
    %cst_25 = arith.constant 2.000000e-01 : f32
    %44 = vector.broadcast %cst_25 : f32 to vector<16x128xf32>
    %45 = arith.mulf %44, %41 : vector<16x128xf32>
    %46 = arith.select %43, %41, %45 : vector<16x128xi1>, vector<16x128xf32>
    %c0_26 = arith.constant 0 : index
    %c0_27 = arith.constant 0 : index
    %47 = vector.load %arg5[%c0_26, %c0_27] : memref<28x128xf32, #tpu.memory_space<vmem>>, vector<16x128xf32>
    tpu.vector_store %arg5[%c0_26, %c0_27], %46 {strides = array<i32>} : memref<28x128xf32, #tpu.memory_space<vmem>>, vector<16x128xf32>,
    %c144 = arith.constant 144 : index
    %c0_28 = arith.constant 0 : index
    %48 = vector.load %arg3[%c144, %c0_28] : memref<336x32xbf16, #tpu.memory_space<vmem>>, vector<16x32xbf16>
    %49 = vector.extract_strided_slice %4 {offsets = [0, 384], sizes = [32, 128], strides = [1, 1]} : vector<32x1152xbf16> to vector<32x128xbf16>
    %cst_29 = arith.constant dense<0.000000e+00> : vector<16x128xf32>
    %50 = tpu.matmul %48, %49, %cst_29 {dimension_numbers = #tpu.dot_dimension_numbers<[1], [0], [0], [1], [0, 0, 1, 1], [], []>} : vector<16x32xbf16>, vector<32x128xbf16>, vector<16x128xf32> -> vector<16x128xf32>
    %c160 = arith.constant 160 : index
    %c0_30 = arith.constant 0 : index
    %51 = vector.load %arg3[%c160, %c0_30] : memref<336x32xbf16, #tpu.memory_space<vmem>>, vector<16x32xbf16>
    %52 = vector.extract_strided_slice %4 {offsets = [0, 512], sizes = [32, 128], strides = [1, 1]} : vector<32x1152xbf16> to vector<32x128xbf16>
    %cst_31 = arith.constant dense<0.000000e+00> : vector<16x128xf32>
    %53 = tpu.matmul %51, %52, %cst_31 {dimension_numbers = #tpu.dot_dimension_numbers<[1], [0], [0], [1], [0, 0, 1, 1], [], []>} : vector<16x32xbf16>, vector<32x128xbf16>, vector<16x128xf32> -> vector<16x128xf32>
    %54 = arith.addf %50, %53 : vector<16x128xf32>
    %c176 = arith.constant 176 : index
    %c0_32 = arith.constant 0 : index
    %55 = vector.load %arg3[%c176, %c0_32] : memref<336x32xbf16, #tpu.memory_space<vmem>>, vector<16x32xbf16>
    %56 = vector.extract_strided_slice %4 {offsets = [0, 640], sizes = [32, 128], strides = [1, 1]} : vector<32x1152xbf16> to vector<32x128xbf16>
    %cst_33 = arith.constant dense<0.000000e+00> : vector<16x128xf32>
    %57 = tpu.matmul %55, %56, %cst_33 {dimension_numbers = #tpu.dot_dimension_numbers<[1], [0], [0], [1], [0, 0, 1, 1], [], []>} : vector<16x32xbf16>, vector<32x128xbf16>, vector<16x128xf32> -> vector<16x128xf32>
    %58 = arith.addf %54, %57 : vector<16x128xf32>
    %c2 = arith.constant 2 : index
    %c0_34 = arith.constant 0 : index
    %59 = vector.load %arg4[%c2, %c0_34] : memref<6x128xf32, #tpu.memory_space<vmem>>, vector<1x128xf32>
    %60 = vector.broadcast %59 : vector<1x128xf32> to vector<16x128xf32>
    %61 = arith.addf %58, %60 : vector<16x128xf32>
    %cst_35 = arith.constant 0.000000e+00 : f32
    %62 = vector.broadcast %cst_35 : f32 to vector<16x128xf32>
    %63 = arith.cmpf oge, %61, %62 : vector<16x128xf32>
    %cst_36 = arith.constant 2.000000e-01 : f32
    %64 = vector.broadcast %cst_36 : f32 to vector<16x128xf32>
    %65 = arith.mulf %64, %61 : vector<16x128xf32>
    %66 = arith.select %63, %61, %65 : vector<16x128xi1>, vector<16x128xf32>
    %67 = arith.addf %66, %46 : vector<16x128xf32>
    %68 = arith.truncf %67 : vector<16x128xf32> to vector<16x128xbf16>
    %c128_37 = arith.constant 128 : index
    %c0_38 = arith.constant 0 : index
    %69 = vector.load %arg2[%c128_37, %c0_38] : memref<384x384xbf16, #tpu.memory_space<vmem>>, vector<128x384xbf16>
    %cst_39 = arith.constant dense<0.000000e+00> : vector<16x384xf32>
    %70 = tpu.matmul %68, %69, %cst_39 {dimension_numbers = #tpu.dot_dimension_numbers<[1], [0], [0], [1], [0, 0, 1, 1], [], []>} : vector<16x128xbf16>, vector<128x384xbf16>, vector<16x384xf32> -> vector<16x384xf32>
    %71 = arith.truncf %70 : vector<16x384xf32> to vector<16x384xbf16>
    %c192 = arith.constant 192 : index
    %c0_40 = arith.constant 0 : index
    %72 = vector.load %arg3[%c192, %c0_40] : memref<336x32xbf16, #tpu.memory_space<vmem>>, vector<8x16xbf16>
    %73 = vector.extract_strided_slice %71 {offsets = [0, 0], sizes = [16, 128], strides = [1, 1]} : vector<16x384xbf16> to vector<16x128xbf16>
    %cst_41 = arith.constant dense<0.000000e+00> : vector<8x128xf32>
    %74 = tpu.matmul %72, %73, %cst_41 {dimension_numbers = #tpu.dot_dimension_numbers<[1], [0], [0], [1], [0, 0, 1, 1], [], []>} : vector<8x16xbf16>, vector<16x128xbf16>, vector<8x128xf32> -> vector<8x128xf32>
    %c208 = arith.constant 208 : index
    %c0_42 = arith.constant 0 : index
    %75 = vector.load %arg3[%c208, %c0_42] : memref<336x32xbf16, #tpu.memory_space<vmem>>, vector<8x16xbf16>
    %76 = vector.extract_strided_slice %71 {offsets = [0, 128], sizes = [16, 128], strides = [1, 1]} : vector<16x384xbf16> to vector<16x128xbf16>
    %cst_43 = arith.constant dense<0.000000e+00> : vector<8x128xf32>
    %77 = tpu.matmul %75, %76, %cst_43 {dimension_numbers = #tpu.dot_dimension_numbers<[1], [0], [0], [1], [0, 0, 1, 1], [], []>} : vector<8x16xbf16>, vector<16x128xbf16>, vector<8x128xf32> -> vector<8x128xf32>
    %78 = arith.addf %74, %77 : vector<8x128xf32>
    %c224 = arith.constant 224 : index
    %c0_44 = arith.constant 0 : index
    %79 = vector.load %arg3[%c224, %c0_44] : memref<336x32xbf16, #tpu.memory_space<vmem>>, vector<8x16xbf16>
    %80 = vector.extract_strided_slice %71 {offsets = [0, 256], sizes = [16, 128], strides = [1, 1]} : vector<16x384xbf16> to vector<16x128xbf16>
    %cst_45 = arith.constant dense<0.000000e+00> : vector<8x128xf32>
    %81 = tpu.matmul %79, %80, %cst_45 {dimension_numbers = #tpu.dot_dimension_numbers<[1], [0], [0], [1], [0, 0, 1, 1], [], []>} : vector<8x16xbf16>, vector<16x128xbf16>, vector<8x128xf32> -> vector<8x128xf32>
    %82 = arith.addf %78, %81 : vector<8x128xf32>
    %c3 = arith.constant 3 : index
    %c0_46 = arith.constant 0 : index
    %83 = vector.load %arg4[%c3, %c0_46] : memref<6x128xf32, #tpu.memory_space<vmem>>, vector<1x128xf32>
    %84 = vector.broadcast %83 : vector<1x128xf32> to vector<8x128xf32>
    %85 = arith.addf %82, %84 : vector<8x128xf32>
    %cst_47 = arith.constant 0.000000e+00 : f32
    %86 = vector.broadcast %cst_47 : f32 to vector<8x128xf32>
    %87 = arith.cmpf oge, %85, %86 : vector<8x128xf32>
    %cst_48 = arith.constant 2.000000e-01 : f32
    %88 = vector.broadcast %cst_48 : f32 to vector<8x128xf32>
    %89 = arith.mulf %88, %85 : vector<8x128xf32>
    %90 = arith.select %87, %85, %89 : vector<8x128xi1>, vector<8x128xf32>
    %c16 = arith.constant 16 : index
    %c0_49 = arith.constant 0 : index
    %91 = vector.load %arg5[%c16, %c0_49] : memref<28x128xf32, #tpu.memory_space<vmem>>, vector<8x128xf32>
    tpu.vector_store %arg5[%c16, %c0_49], %90 {strides = array<i32>} : memref<28x128xf32, #tpu.memory_space<vmem>>, vector<8x128xf32>,
    %c240 = arith.constant 240 : index
    %c0_50 = arith.constant 0 : index
    %92 = vector.load %arg3[%c240, %c0_50] : memref<336x32xbf16, #tpu.memory_space<vmem>>, vector<8x32xbf16>
    %93 = vector.extract_strided_slice %4 {offsets = [0, 768], sizes = [32, 128], strides = [1, 1]} : vector<32x1152xbf16> to vector<32x128xbf16>
    %cst_51 = arith.constant dense<0.000000e+00> : vector<8x128xf32>
    %94 = tpu.matmul %92, %93, %cst_51 {dimension_numbers = #tpu.dot_dimension_numbers<[1], [0], [0], [1], [0, 0, 1, 1], [], []>} : vector<8x32xbf16>, vector<32x128xbf16>, vector<8x128xf32> -> vector<8x128xf32>
    %c256 = arith.constant 256 : index
    %c0_52 = arith.constant 0 : index
    %95 = vector.load %arg3[%c256, %c0_52] : memref<336x32xbf16, #tpu.memory_space<vmem>>, vector<8x32xbf16>
    %96 = vector.extract_strided_slice %4 {offsets = [0, 896], sizes = [32, 128], strides = [1, 1]} : vector<32x1152xbf16> to vector<32x128xbf16>
    %cst_53 = arith.constant dense<0.000000e+00> : vector<8x128xf32>
    %97 = tpu.matmul %95, %96, %cst_53 {dimension_numbers = #tpu.dot_dimension_numbers<[1], [0], [0], [1], [0, 0, 1, 1], [], []>} : vector<8x32xbf16>, vector<32x128xbf16>, vector<8x128xf32> -> vector<8x128xf32>
    %98 = arith.addf %94, %97 : vector<8x128xf32>
    %c272 = arith.constant 272 : index
    %c0_54 = arith.constant 0 : index
    %99 = vector.load %arg3[%c272, %c0_54] : memref<336x32xbf16, #tpu.memory_space<vmem>>, vector<8x32xbf16>
    %100 = vector.extract_strided_slice %4 {offsets = [0, 1024], sizes = [32, 128], strides = [1, 1]} : vector<32x1152xbf16> to vector<32x128xbf16>
    %cst_55 = arith.constant dense<0.000000e+00> : vector<8x128xf32>
    %101 = tpu.matmul %99, %100, %cst_55 {dimension_numbers = #tpu.dot_dimension_numbers<[1], [0], [0], [1], [0, 0, 1, 1], [], []>} : vector<8x32xbf16>, vector<32x128xbf16>, vector<8x128xf32> -> vector<8x128xf32>
    %102 = arith.addf %98, %101 : vector<8x128xf32>
    %c4 = arith.constant 4 : index
    %c0_56 = arith.constant 0 : index
    %103 = vector.load %arg4[%c4, %c0_56] : memref<6x128xf32, #tpu.memory_space<vmem>>, vector<1x128xf32>
    %104 = vector.broadcast %103 : vector<1x128xf32> to vector<8x128xf32>
    %105 = arith.addf %102, %104 : vector<8x128xf32>
    %cst_57 = arith.constant 0.000000e+00 : f32
    %106 = vector.broadcast %cst_57 : f32 to vector<8x128xf32>
    %107 = arith.cmpf oge, %105, %106 : vector<8x128xf32>
    %cst_58 = arith.constant 2.000000e-01 : f32
    %108 = vector.broadcast %cst_58 : f32 to vector<8x128xf32>
    %109 = arith.mulf %108, %105 : vector<8x128xf32>
    %110 = arith.select %107, %105, %109 : vector<8x128xi1>, vector<8x128xf32>
    %111 = arith.addf %110, %90 : vector<8x128xf32>
    %112 = arith.truncf %111 : vector<8x128xf32> to vector<8x128xbf16>
    %c256_59 = arith.constant 256 : index
    %c0_60 = arith.constant 0 : index
    %113 = vector.load %arg2[%c256_59, %c0_60] : memref<384x384xbf16, #tpu.memory_space<vmem>>, vector<128x384xbf16>
    %cst_61 = arith.constant dense<0.000000e+00> : vector<8x384xf32>
    %114 = tpu.matmul %112, %113, %cst_61 {dimension_numbers = #tpu.dot_dimension_numbers<[1], [0], [0], [1], [0, 0, 1, 1], [], []>} : vector<8x128xbf16>, vector<128x384xbf16>, vector<8x384xf32> -> vector<8x384xf32>
    %115 = arith.truncf %114 : vector<8x384xf32> to vector<8x384xbf16>
    %c288 = arith.constant 288 : index
    %c0_62 = arith.constant 0 : index
    %116 = vector.load %arg3[%c288, %c0_62] : memref<336x32xbf16, #tpu.memory_space<vmem>>, vector<4x8xbf16>
    %117 = vector.extract_strided_slice %115 {offsets = [0, 0], sizes = [8, 128], strides = [1, 1]} : vector<8x384xbf16> to vector<8x128xbf16>
    %cst_63 = arith.constant dense<0.000000e+00> : vector<4x128xf32>
    %118 = tpu.matmul %116, %117, %cst_63 {dimension_numbers = #tpu.dot_dimension_numbers<[1], [0], [0], [1], [0, 0, 1, 1], [], []>} : vector<4x8xbf16>, vector<8x128xbf16>, vector<4x128xf32> -> vector<4x128xf32>
    %c304 = arith.constant 304 : index
    %c0_64 = arith.constant 0 : index
    %119 = vector.load %arg3[%c304, %c0_64] : memref<336x32xbf16, #tpu.memory_space<vmem>>, vector<4x8xbf16>
    %120 = vector.extract_strided_slice %115 {offsets = [0, 128], sizes = [8, 128], strides = [1, 1]} : vector<8x384xbf16> to vector<8x128xbf16>
    %cst_65 = arith.constant dense<0.000000e+00> : vector<4x128xf32>
    %121 = tpu.matmul %119, %120, %cst_65 {dimension_numbers = #tpu.dot_dimension_numbers<[1], [0], [0], [1], [0, 0, 1, 1], [], []>} : vector<4x8xbf16>, vector<8x128xbf16>, vector<4x128xf32> -> vector<4x128xf32>
    %122 = arith.addf %118, %121 : vector<4x128xf32>
    %c320 = arith.constant 320 : index
    %c0_66 = arith.constant 0 : index
    %123 = vector.load %arg3[%c320, %c0_66] : memref<336x32xbf16, #tpu.memory_space<vmem>>, vector<4x8xbf16>
    %124 = vector.extract_strided_slice %115 {offsets = [0, 256], sizes = [8, 128], strides = [1, 1]} : vector<8x384xbf16> to vector<8x128xbf16>
    %cst_67 = arith.constant dense<0.000000e+00> : vector<4x128xf32>
    %125 = tpu.matmul %123, %124, %cst_67 {dimension_numbers = #tpu.dot_dimension_numbers<[1], [0], [0], [1], [0, 0, 1, 1], [], []>} : vector<4x8xbf16>, vector<8x128xbf16>, vector<4x128xf32> -> vector<4x128xf32>
    %126 = arith.addf %122, %125 : vector<4x128xf32>
    %c5 = arith.constant 5 : index
    %c0_68 = arith.constant 0 : index
    %127 = vector.load %arg4[%c5, %c0_68] : memref<6x128xf32, #tpu.memory_space<vmem>>, vector<1x128xf32>
    %128 = vector.broadcast %127 : vector<1x128xf32> to vector<4x128xf32>
    %129 = arith.addf %126, %128 : vector<4x128xf32>
    %cst_69 = arith.constant 0.000000e+00 : f32
    %130 = vector.broadcast %cst_69 : f32 to vector<4x128xf32>
    %131 = arith.cmpf oge, %129, %130 : vector<4x128xf32>
    %cst_70 = arith.constant 2.000000e-01 : f32
    %132 = vector.broadcast %cst_70 : f32 to vector<4x128xf32>
    %133 = arith.mulf %132, %129 : vector<4x128xf32>
    %134 = arith.select %131, %129, %133 : vector<4x128xi1>, vector<4x128xf32>
    %c24 = arith.constant 24 : index
    %c0_71 = arith.constant 0 : index
    %135 = vector.load %arg5[%c24, %c0_71] : memref<28x128xf32, #tpu.memory_space<vmem>>, vector<4x128xf32>
    tpu.vector_store %arg5[%c24, %c0_71], %134 {strides = array<i32>} : memref<28x128xf32, #tpu.memory_space<vmem>>, vector<4x128xf32>,
    return
  }
}

</mosaic_0001>

<llo_original>
// kernel: _lambda_.1
$region0: #{_lambda_.1}
  #allocation0 [shape = 'u32[]', space=smem, size = 0x4, offset = 0x4, fixed_abs, tag = 'smem constant byte address 0x4 - core index']
  #allocation1 [shape = 'u32[144,128]{1,0:T(1,128)}', space=vmem, size = 0x12000, scoped, tag = 'internal scratch']
  %s0 = inlined_call_operand.vmem [shape: f32[32,16], index: 0, kind: input, shape index: {}]
  %s1 = inlined_call_operand.vmem [shape: bf16[16,1152], index: 1, kind: input, shape index: {}]
  %s2 = inlined_call_operand.vmem [shape: bf16[384,384], index: 2, kind: input, shape index: {}]
  %s3 = inlined_call_operand.vmem [shape: bf16[336,32], index: 3, kind: input, shape index: {}]
  %s4 = inlined_call_operand.vmem [shape: f32[6,128], index: 4, kind: input, shape index: {}]
  %s5 = inlined_call_operand.vmem [shape: f32[28,128], index: 5, kind: output, shape index: {}]
  %s6 = sld [smem:[#allocation0]]
  $region30: #{_lambda_.1} parent=0
    _
  %s8 = ssub.s32 1, %s6
  %s9 = scalar_select 0, %s8, %s6
  // Predicated region
  $region2: #{_lambda_.1} parent=0 // pred_check
    _
  $region3: #{_lambda_.1} parent=0 // pred_check_branch
    %11 = sbr.rel (0) target = $region5
  $region4: #{_lambda_.1} parent=0 // pred_region
    _
  $region5: #{_lambda_.1} parent=0 // pred_fallthru
    _
  // Predicated region
  $region6: #{_lambda_.1} parent=0 // pred_check
    _
  $region7: #{_lambda_.1} parent=0 // pred_check_branch
    %13 = sbr.rel (0) target = $region9
  $region8: #{_lambda_.1} parent=0 // pred_region
    _
  $region9: #{_lambda_.1} parent=0 // pred_fallthru
    _
  // Predicated region
  $region10: #{_lambda_.1} parent=0 // pred_check
    _
  $region11: #{_lambda_.1} parent=0 // pred_check_branch
    %15 = sbr.rel (0) target = $region13
  $region12: #{_lambda_.1} parent=0 // pred_region
    _
  $region13: #{_lambda_.1} parent=0 // pred_fallthru
    _
  // Predicated region
  $region14: #{_lambda_.1} parent=0 // pred_check
    _
  $region15: #{_lambda_.1} parent=0 // pred_check_branch
    %17 = sbr.rel (0) target = $region17
  $region16: #{_lambda_.1} parent=0 // pred_region
    _
  $region17: #{_lambda_.1} parent=0 // pred_fallthru
    _
  // Predicated region
  $region18: #{_lambda_.1} parent=0 // pred_check
    _
  $region19: #{_lambda_.1} parent=0 // pred_check_branch
    %19 = sbr.rel (0) target = $region21
  $region20: #{_lambda_.1} parent=0 // pred_region
    _
  $region21: #{_lambda_.1} parent=0 // pred_fallthru
    _
  %v21 = vld [vmem:[%s0] sm:$0xff]
  %v22 = vld [vmem:[%s0 + $0x8] sm:$0xff]
  %v23 = vld [vmem:[%s0 + $0x10] sm:$0xff]
  %v24 = vld [vmem:[%s0 + $0x18] sm:$0xff]
  %v25 = vpack.c.bf16 %v22, %v21
  %v26 = vpack.c.bf16 %v24, %v23
  %v27 = vld [vmem:[%s1] sm:$0xff]
  %v28 = vld [vmem:[%s1 + $0x8] sm:$0xff]
  %v29 = vld [vmem:[%s1 + $0x10] sm:$0xff]
  %v30 = vld [vmem:[%s1 + $0x18] sm:$0xff]
  %v31 = vld [vmem:[%s1 + $0x20] sm:$0xf]
  %v32 = vld [vmem:[%s1 + $0x24] sm:$0xff]
  %v33 = vld [vmem:[%s1 + $0x2c] sm:$0xff]
  %v34 = vld [vmem:[%s1 + $0x34] sm:$0xff]
  %v35 = vld [vmem:[%s1 + $0x3c] sm:$0xff]
  %v36 = vld [vmem:[%s1 + $0x44] sm:$0xf]
  %v47 = vunpack.c.l.b16 %v27
  %v48 = vunpack.c.h.b16 %v27
  %v49 = vunpack.c.l.b16 %v28
  %v50 = vunpack.c.h.b16 %v28
  %v51 = vunpack.c.l.b16 %v29
  %v52 = vunpack.c.h.b16 %v29
  %v53 = vunpack.c.l.b16 %v30
  %v54 = vunpack.c.h.b16 %v30
  %v55 = vunpack.c.l.b16 %v31
  %v56 = vunpack.c.l.b16 %v32
  %v57 = vunpack.c.h.b16 %v32
  %v58 = vunpack.c.l.b16 %v33
  %v59 = vunpack.c.h.b16 %v33
  %v60 = vunpack.c.l.b16 %v34
  %v61 = vunpack.c.h.b16 %v34
  %v62 = vunpack.c.l.b16 %v35
  %v63 = vunpack.c.h.b16 %v35
  %v64 = vunpack.c.l.b16 %v36
  %v65 = vpack.c.b16 %v56, %v47
  %v66 = vpack.c.b16 %v57, %v48
  %v67 = vpack.c.b16 %v58, %v49
  %v68 = vpack.c.b16 %v59, %v50
  %v69 = vpack.c.b16 %v60, %v51
  %v70 = vpack.c.b16 %v61, %v52
  %v71 = vpack.c.b16 %v62, %v53
  %v72 = vpack.c.b16 %v63, %v54
  %v73 = vpack.c.b16 %v64, %v55
  %vm83 = vcmask 130048
  %v85 = vsel %vm83, %v25, 0
  %v88 = vsel %vm83, %v26, 0
  %90 = vmatprep.subr.bf16.mxu0 %v66
  %91 = vmatpush1.bf16.msra.mxu0 %v65
  %92 = vmatprep.subr.bf16.mxu0 0
  %93 = vmatpush1.bf16.msra.mxu0 0
  %94 = vmatprep.subr.bf16.mxu0 0
  %95 = vmatpush1.bf16.msra.mxu0 0
  %96 = vmatprep.subr.bf16.mxu0 0
  %97 = vmatpush1.bf16.msra.mxu0 0
  %98 = vmatprep.subr.bf16.mxu0 0
  %99 = vmatpush1.bf16.msra.mxu0 0
  %100 = vmatprep.subr.bf16.mxu0 0
  %101 = vmatpush1.bf16.msra.mxu0 0
  %102 = vmatprep.subr.bf16.mxu0 0
  %103 = vmatpush1.bf16.msra.mxu0 0
  %104 = vmatprep.subr.bf16.mxu0 0
  %105 = vmatpush1.bf16.msra.mxu0 0
  %106 = vmatprep.subr.bf16.mxu0 0
  %107 = vmatpush1.bf16.msra.mxu0 0
  %108 = vmatprep.subr.bf16.mxu0 0
  %109 = vmatpush1.bf16.msra.mxu0 0
  %110 = vmatprep.subr.bf16.mxu0 0
  %111 = vmatpush1.bf16.msra.mxu0 0
  %112 = vmatprep.subr.bf16.mxu0 0
  %113 = vmatpush1.bf16.msra.mxu0 0
  %114 = vmatprep.subr.bf16.mxu0 0
  %115 = vmatpush1.bf16.msra.mxu0 0
  %116 = vmatprep.subr.bf16.mxu0 0
  %117 = vmatpush1.bf16.msra.mxu0 0
  %118 = vmatprep.subr.bf16.mxu0 0
  %119 = vmatpush1.bf16.msra.mxu0 0
  %120 = vmatprep.subr.bf16.mxu0 0
  %121 = vmatpush1.bf16.msra.mxu0 0
  %122 = vmatprep.mubr.bf16.mxu0 0
  %123 = vmatmul.mubr.bf16.gmra.mrb[0].mxu0 %v85
  %v124 = vpop.f32.mrb[0].mxu0
  %v125 = vadd.f32 0.0, %v124
  %v126 = vpop.f32.mrb[0].mxu0
  %v127 = vadd.f32 0.0, %v126
  %v128 = vpop.f32.mrb[0].mxu0
  %v129 = vadd.f32 0.0, %v128
  %v130 = vpop.f32.mrb[0].mxu0
  %v131 = vadd.f32 0.0, %v130
  %132 = vmatprep.mubr.bf16.mxu0 0
  %133 = vmatmul.mubr.bf16.gmra.mrb[0].mxu0 %v88
  %v134 = vpop.f32.mrb[0].mxu0
  %v135 = vadd.f32 0.0, %v134
  %v136 = vpop.f32.mrb[0].mxu0
  %v137 = vadd.f32 0.0, %v136
  %v138 = vpop.f32.mrb[0].mxu0
  %v139 = vadd.f32 0.0, %v138
  %v140 = vpop.f32.mrb[0].mxu0
  %v141 = vadd.f32 0.0, %v140
  %142 = vdwg.mxu0
  %143 = vmatprep.subr.bf16.mxu0 %v68
  %144 = vmatpush1.bf16.msra.mxu0 %v67
  %145 = vmatprep.subr.bf16.mxu0 0
  %146 = vmatpush1.bf16.msra.mxu0 0
  %147 = vmatprep.subr.bf16.mxu0 0
  %148 = vmatpush1.bf16.msra.mxu0 0
  %149 = vmatprep.subr.bf16.mxu0 0
  %150 = vmatpush1.bf16.msra.mxu0 0
  %151 = vmatprep.subr.bf16.mxu0 0
  %152 = vmatpush1.bf16.msra.mxu0 0
  %153 = vmatprep.subr.bf16.mxu0 0
  %154 = vmatpush1.bf16.msra.mxu0 0
  %155 = vmatprep.subr.bf16.mxu0 0
  %156 = vmatpush1.bf16.msra.mxu0 0
  %157 = vmatprep.subr.bf16.mxu0 0
  %158 = vmatpush1.bf16.msra.mxu0 0
  %159 = vmatprep.subr.bf16.mxu0 0
  %160 = vmatpush1.bf16.msra.mxu0 0
  %161 = vmatprep.subr.bf16.mxu0 0
  %162 = vmatpush1.bf16.msra.mxu0 0
  %163 = vmatprep.subr.bf16.mxu0 0
  %164 = vmatpush1.bf16.msra.mxu0 0
  %165 = vmatprep.subr.bf16.mxu0 0
  %166 = vmatpush1.bf16.msra.mxu0 0
  %167 = vmatprep.subr.bf16.mxu0 0
  %168 = vmatpush1.bf16.msra.mxu0 0
  %169 = vmatprep.subr.bf16.mxu0 0
  %170 = vmatpush1.bf16.msra.mxu0 0
  %171 = vmatprep.subr.bf16.mxu0 0
  %172 = vmatpush1.bf16.msra.mxu0 0
  %173 = vmatprep.subr.bf16.mxu0 0
  %174 = vmatpush1.bf16.msra.mxu0 0
  %175 = vmatprep.mubr.bf16.mxu0 0
  %176 = vmatmul.mubr.bf16.gmra.mrb[0].mxu0 %v85
  %v177 = vpop.f32.mrb[0].mxu0
  %v178 = vadd.f32 0.0, %v177
  %v179 = vpop.f32.mrb[0].mxu0
  %v180 = vadd.f32 0.0, %v179
  %v181 = vpop.f32.mrb[0].mxu0
  %v182 = vadd.f32 0.0, %v181
  %v183 = vpop.f32.mrb[0].mxu0
  %v184 = vadd.f32 0.0, %v183
  %185 = vmatprep.mubr.bf16.mxu0 0
  %186 = vmatmul.mubr.bf16.gmra.mrb[0].mxu0 %v88
  %v187 = vpop.f32.mrb[0].mxu0
  %v188 = vadd.f32 0.0, %v187
  %v189 = vpop.f32.mrb[0].mxu0
  %v190 = vadd.f32 0.0, %v189
  %v191 = vpop.f32.mrb[0].mxu0
  %v192 = vadd.f32 0.0, %v191
  %v193 = vpop.f32.mrb[0].mxu0
  %v194 = vadd.f32 0.0, %v193
  %195 = vdwg.mxu0
  %196 = vmatprep.subr.bf16.mxu0 %v70
  %197 = vmatpush1.bf16.msra.mxu0 %v69
  %198 = vmatprep.subr.bf16.mxu0 0
  %199 = vmatpush1.bf16.msra.mxu0 0
  %200 = vmatprep.subr.bf16.mxu0 0
  %201 = vmatpush1.bf16.msra.mxu0 0
  %202 = vmatprep.subr.bf16.mxu0 0
  %203 = vmatpush1.bf16.msra.mxu0 0
  %204 = vmatprep.subr.bf16.mxu0 0
  %205 = vmatpush1.bf16.msra.mxu0 0
  %206 = vmatprep.subr.bf16.mxu0 0
  %207 = vmatpush1.bf16.msra.mxu0 0
  %208 = vmatprep.subr.bf16.mxu0 0
  %209 = vmatpush1.bf16.msra.mxu0 0
  %210 = vmatprep.subr.bf16.mxu0 0
  %211 = vmatpush1.bf16.msra.mxu0 0
  %212 = vmatprep.subr.bf16.mxu0 0
  %213 = vmatpush1.bf16.msra.mxu0 0
  %214 = vmatprep.subr.bf16.mxu0 0
  %215 = vmatpush1.bf16.msra.mxu0 0
  %216 = vmatprep.subr.bf16.mxu0 0
  %217 = vmatpush1.bf16.msra.mxu0 0
  %218 = vmatprep.subr.bf16.mxu0 0
  %219 = vmatpush1.bf16.msra.mxu0 0
  %220 = vmatprep.subr.bf16.mxu0 0
  %221 = vmatpush1.bf16.msra.mxu0 0
  %222 = vmatprep.subr.bf16.mxu0 0
  %223 = vmatpush1.bf16.msra.mxu0 0
  %224 = vmatprep.subr.bf16.mxu0 0
  %225 = vmatpush1.bf16.msra.mxu0 0
  %226 = vmatprep.subr.bf16.mxu0 0
  %227 = vmatpush1.bf16.msra.mxu0 0
  %228 = vmatprep.mubr.bf16.mxu0 0
  %229 = vmatmul.mubr.bf16.gmra.mrb[0].mxu0 %v85
  %v230 = vpop.f32.mrb[0].mxu0
  %v231 = vadd.f32 0.0, %v230
  %v232 = vpop.f32.mrb[0].mxu0
  %v233 = vadd.f32 0.0, %v232
  %v234 = vpop.f32.mrb[0].mxu0
  %v235 = vadd.f32 0.0, %v234
  %v236 = vpop.f32.mrb[0].mxu0
  %v237 = vadd.f32 0.0, %v236
  %238 = vmatprep.mubr.bf16.mxu0 0
  %239 = vmatmul.mubr.bf16.gmra.mrb[0].mxu0 %v88
  %v240 = vpop.f32.mrb[0].mxu0
  %v241 = vadd.f32 0.0, %v240
  %v242 = vpop.f32.mrb[0].mxu0
  %v243 = vadd.f32 0.0, %v242
  %v244 = vpop.f32.mrb[0].mxu0
  %v245 = vadd.f32 0.0, %v244
  %v246 = vpop.f32.mrb[0].mxu0
  %v247 = vadd.f32 0.0, %v246
  %248 = vdwg.mxu0
  %249 = vmatprep.subr.bf16.mxu0 %v72
  %250 = vmatpush1.bf16.msra.mxu0 %v71
  %251 = vmatprep.subr.bf16.mxu0 0
  %252 = vmatpush1.bf16.msra.mxu0 0
  %253 = vmatprep.subr.bf16.mxu0 0
  %254 = vmatpush1.bf16.msra.mxu0 0
  %255 = vmatprep.subr.bf16.mxu0 0
  %256 = vmatpush1.bf16.msra.mxu0 0
  %257 = vmatprep.subr.bf16.mxu0 0
  %258 = vmatpush1.bf16.msra.mxu0 0
  %259 = vmatprep.subr.bf16.mxu0 0
  %260 = vmatpush1.bf16.msra.mxu0 0
  %261 = vmatprep.subr.bf16.mxu0 0
  %262 = vmatpush1.bf16.msra.mxu0 0
  %263 = vmatprep.subr.bf16.mxu0 0
  %264 = vmatpush1.bf16.msra.mxu0 0
  %265 = vmatprep.subr.bf16.mxu0 0
  %266 = vmatpush1.bf16.msra.mxu0 0
  %267 = vmatprep.subr.bf16.mxu0 0
  %268 = vmatpush1.bf16.msra.mxu0 0
  %269 = vmatprep.subr.bf16.mxu0 0
  %270 = vmatpush1.bf16.msra.mxu0 0
  %271 = vmatprep.subr.bf16.mxu0 0
  %272 = vmatpush1.bf16.msra.mxu0 0
  %273 = vmatprep.subr.bf16.mxu0 0
  %274 = vmatpush1.bf16.msra.mxu0 0
  %275 = vmatprep.subr.bf16.mxu0 0
  %276 = vmatpush1.bf16.msra.mxu0 0
  %277 = vmatprep.subr.bf16.mxu0 0
  %278 = vmatpush1.bf16.msra.mxu0 0
  %279 = vmatprep.subr.bf16.mxu0 0
  %280 = vmatpush1.bf16.msra.mxu0 0
  %281 = vmatprep.mubr.bf16.mxu0 0
  %282 = vmatmul.mubr.bf16.gmra.mrb[0].mxu0 %v85
  %v283 = vpop.f32.mrb[0].mxu0
  %v284 = vadd.f32 0.0, %v283
  %v285 = vpop.f32.mrb[0].mxu0
  %v286 = vadd.f32 0.0, %v285
  %v287 = vpop.f32.mrb[0].mxu0
  %v288 = vadd.f32 0.0, %v287
  %v289 = vpop.f32.mrb[0].mxu0
  %v290 = vadd.f32 0.0, %v289
  %291 = vmatprep.mubr.bf16.mxu0 0
  %292 = vmatmul.mubr.bf16.gmra.mrb[0].mxu0 %v88
  %v293 = vpop.f32.mrb[0].mxu0
  %v294 = vadd.f32 0.0, %v293
  %v295 = vpop.f32.mrb[0].mxu0
  %v296 = vadd.f32 0.0, %v295
  %v297 = vpop.f32.mrb[0].mxu0
  %v298 = vadd.f32 0.0, %v297
  %v299 = vpop.f32.mrb[0].mxu0
  %v300 = vadd.f32 0.0, %v299
  %301 = vdwg.mxu0
  %302 = vmatprep.subr.bf16.mxu0 0
  %303 = vmatpush1.bf16.msra.mxu0 %v73
  %304 = vmatprep.subr.bf16.mxu0 0
  %305 = vmatpush1.bf16.msra.mxu0 0
  %306 = vmatprep.subr.bf16.mxu0 0
  %307 = vmatpush1.bf16.msra.mxu0 0
  %308 = vmatprep.subr.bf16.mxu0 0
  %309 = vmatpush1.bf16.msra.mxu0 0
  %310 = vmatprep.subr.bf16.mxu0 0
  %311 = vmatpush1.bf16.msra.mxu0 0
  %312 = vmatprep.subr.bf16.mxu0 0
  %313 = vmatpush1.bf16.msra.mxu0 0
  %314 = vmatprep.subr.bf16.mxu0 0
  %315 = vmatpush1.bf16.msra.mxu0 0
  %316 = vmatprep.subr.bf16.mxu0 0
  %317 = vmatpush1.bf16.msra.mxu0 0
  %318 = vmatprep.subr.bf16.mxu0 0
  %319 = vmatpush1.bf16.msra.mxu0 0
  %320 = vmatprep.subr.bf16.mxu0 0
  %321 = vmatpush1.bf16.msra.mxu0 0
  %322 = vmatprep.subr.bf16.mxu0 0
  %323 = vmatpush1.bf16.msra.mxu0 0
  %324 = vmatprep.subr.bf16.mxu0 0
  %325 = vmatpush1.bf16.msra.mxu0 0
  %326 = vmatprep.subr.bf16.mxu0 0
  %327 = vmatpush1.bf16.msra.mxu0 0
  %328 = vmatprep.subr.bf16.mxu0 0
  %329 = vmatpush1.bf16.msra.mxu0 0
  %330 = vmatprep.subr.bf16.mxu0 0
  %331 = vmatpush1.bf16.msra.mxu0 0
  %332 = vmatprep.subr.bf16.mxu0 0
  %333 = vmatpush1.bf16.msra.mxu0 0
  %334 = vmatprep.mubr.bf16.mxu0 0
  %335 = vmatmul.mubr.bf16.gmra.mrb[0].mxu0 %v85
  %v336 = vpop.f32.mrb[0].mxu0
  %v337 = vadd.f32 0.0, %v336
  %v338 = vpop.f32.mrb[0].mxu0
  %v339 = vpop.f32.mrb[0].mxu0
  %v340 = vadd.f32 0.0, %v339
  %v341 = vpop.f32.mrb[0].mxu0
  %342 = vmatprep.mubr.bf16.mxu0 0
  %343 = vmatmul.mubr.bf16.gmra.mrb[0].mxu0 %v88
  %v344 = vpop.f32.mrb[0].mxu0
  %v345 = vadd.f32 0.0, %v344
  %v346 = vpop.f32.mrb[0].mxu0
  %v347 = vpop.f32.mrb[0].mxu0
  %v348 = vadd.f32 0.0, %v347
  %v349 = vpop.f32.mrb[0].mxu0
  %350 = vdwg.mxu0
  %v351 = vpack.c.bf16 %v129, %v125
  %v352 = vpack.c.bf16 %v131, %v127
  %v353 = vpack.c.bf16 %v182, %v178
  %v354 = vpack.c.bf16 %v184, %v180
  %v355 = vpack.c.bf16 %v235, %v231
  %v356 = vpack.c.bf16 %v237, %v233
  %v357 = vpack.c.bf16 %v288, %v284
  %v358 = vpack.c.bf16 %v290, %v286
  %v359 = vpack.c.bf16 %v340, %v337
  %v360 = vpack.c.bf16 %v139, %v135
  %v361 = vpack.c.bf16 %v141, %v137
  %v362 = vpack.c.bf16 %v192, %v188
  %v363 = vpack.c.bf16 %v194, %v190
  %v364 = vpack.c.bf16 %v245, %v241
  %v365 = vpack.c.bf16 %v247, %v243
  %v366 = vpack.c.bf16 %v298, %v294
  %v367 = vpack.c.bf16 %v300, %v296
  %v368 = vpack.c.bf16 %v348, %v345
  %v369 = vld [vmem:[%s3] sm:$0xf]
  %v370 = vld [vmem:[%s3 + $0x4] sm:$0xf]
  %v371 = vld [vmem:[%s3 + $0x8] sm:$0xf]
  %v372 = vld [vmem:[%s3 + $0xc] sm:$0xf]
  %v373 = vld [vmem:[%s3 + $0x10] sm:$0xf]
  %v374 = vld [vmem:[%s3 + $0x14] sm:$0xf]
  %v375 = vld [vmem:[%s3 + $0x18] sm:$0xf]
  %v376 = vld [vmem:[%s3 + $0x1c] sm:$0xf]
  %v381 = vunpack.c.l.b16 %v373
  %v382 = vunpack.c.l.b16 %v374
  %v383 = vunpack.c.l.b16 %v375
  %v384 = vunpack.c.l.b16 %v376
  %v385 = vpack.c.b16 %v382, %v381
  %v386 = vpack.c.b16 %v384, %v383
  %vm387 = vcmask 261120
  %v389 = vsel %vm387, %v385, 0
  %v392 = vsel %vm387, %v386, 0
  %394 = vmatprep.subr.bf16.mxu0 0
  %395 = vmatpush1.bf16.msra.mxu0 %v352
  %396 = vmatprep.subr.bf16.mxu0 0
  %397 = vmatpush1.bf16.msra.mxu0 %v361
  %398 = vmatprep.subr.bf16.mxu0 0
  %399 = vmatpush1.bf16.msra.mxu0 0
  %400 = vmatprep.subr.bf16.mxu0 0
  %401 = vmatpush1.bf16.msra.mxu0 0
  %402 = vmatprep.subr.bf16.mxu0 0
  %403 = vmatpush1.bf16.msra.mxu0 0
  %404 = vmatprep.subr.bf16.mxu0 0
  %405 = vmatpush1.bf16.msra.mxu0 0
  %406 = vmatprep.subr.bf16.mxu0 0
  %407 = vmatpush1.bf16.msra.mxu0 0
  %408 = vmatprep.subr.bf16.mxu0 0
  %409 = vmatpush1.bf16.msra.mxu0 0
  %410 = vmatprep.subr.bf16.mxu0 0
  %411 = vmatpush1.bf16.msra.mxu0 0
  %412 = vmatprep.subr.bf16.mxu0 0
  %413 = vmatpush1.bf16.msra.mxu0 0
  %414 = vmatprep.subr.bf16.mxu0 0
  %415 = vmatpush1.bf16.msra.mxu0 0
  %416 = vmatprep.subr.bf16.mxu0 0
  %417 = vmatpush1.bf16.msra.mxu0 0
  %418 = vmatprep.subr.bf16.mxu0 0
  %419 = vmatpush1.bf16.msra.mxu0 0
  %420 = vmatprep.subr.bf16.mxu0 0
  %421 = vmatpush1.bf16.msra.mxu0 0
  %422 = vmatprep.subr.bf16.mxu0 0
  %423 = vmatpush1.bf16.msra.mxu0 0
  %424 = vmatprep.subr.bf16.mxu0 0
  %425 = vmatpush1.bf16.msra.mxu0 0
  %426 = vmatprep.mubr.bf16.mxu0 0
  %427 = vmatmul.mubr.bf16.gmra.mrb[0].mxu0 %v389
  %v428 = vpop.f32.mrb[0].mxu0
  %v429 = vadd.f32 0.0, %v428
  %v430 = vpop.f32.mrb[0].mxu0
  %v431 = vpop.f32.mrb[0].mxu0
  %v432 = vadd.f32 0.0, %v431
  %v433 = vpop.f32.mrb[0].mxu0
  %434 = vmatprep.mubr.bf16.mxu0 0
  %435 = vmatmul.mubr.bf16.gmra.mrb[0].mxu0 %v392
  %v436 = vpop.f32.mrb[0].mxu0
  %v437 = vadd.f32 0.0, %v436
  %v438 = vpop.f32.mrb[0].mxu0
  %v439 = vpop.f32.mrb[0].mxu0
  %v440 = vadd.f32 0.0, %v439
  %v441 = vpop.f32.mrb[0].mxu0
  %442 = vdwg.mxu0
  %v447 = vunpack.c.l.b16 %v369
  %v448 = vunpack.c.l.b16 %v370
  %v449 = vunpack.c.l.b16 %v371
  %v450 = vunpack.c.l.b16 %v372
  %v451 = vpack.c.b16 %v448, %v447
  %v452 = vpack.c.b16 %v450, %v449
  %v454 = vsel %vm387, %v451, 0
  %v457 = vsel %vm387, %v452, 0
  %459 = vmatprep.subr.bf16.mxu0 0
  %460 = vmatpush1.bf16.msra.mxu0 %v351
  %461 = vmatprep.subr.bf16.mxu0 0
  %462 = vmatpush1.bf16.msra.mxu0 %v360
  %463 = vmatprep.subr.bf16.mxu0 0
  %464 = vmatpush1.bf16.msra.mxu0 0
  %465 = vmatprep.subr.bf16.mxu0 0
  %466 = vmatpush1.bf16.msra.mxu0 0
  %467 = vmatprep.subr.bf16.mxu0 0
  %468 = vmatpush1.bf16.msra.mxu0 0
  %469 = vmatprep.subr.bf16.mxu0 0
  %470 = vmatpush1.bf16.msra.mxu0 0
  %471 = vmatprep.subr.bf16.mxu0 0
  %472 = vmatpush1.bf16.msra.mxu0 0
  %473 = vmatprep.subr.bf16.mxu0 0
  %474 = vmatpush1.bf16.msra.mxu0 0
  %475 = vmatprep.subr.bf16.mxu0 0
  %476 = vmatpush1.bf16.msra.mxu0 0
  %477 = vmatprep.subr.bf16.mxu0 0
  %478 = vmatpush1.bf16.msra.mxu0 0
  %479 = vmatprep.subr.bf16.mxu0 0
  %480 = vmatpush1.bf16.msra.mxu0 0
  %481 = vmatprep.subr.bf16.mxu0 0
  %482 = vmatpush1.bf16.msra.mxu0 0
  %483 = vmatprep.subr.bf16.mxu0 0
  %484 = vmatpush1.bf16.msra.mxu0 0
  %485 = vmatprep.subr.bf16.mxu0 0
  %486 = vmatpush1.bf16.msra.mxu0 0
  %487 = vmatprep.subr.bf16.mxu0 0
  %488 = vmatpush1.bf16.msra.mxu0 0
  %489 = vmatprep.subr.bf16.mxu0 0
  %490 = vmatpush1.bf16.msra.mxu0 0
  %491 = vmatprep.mubr.bf16.mxu0 0
  %492 = vmatmul.mubr.bf16.gmra.mrb[0].mxu0 %v454
  %v493 = vpop.f32.mrb[0].mxu0
  %v494 = vadd.f32 %v429, %v493
  %v495 = vpop.f32.mrb[0].mxu0
  %v496 = vpop.f32.mrb[0].mxu0
  %v497 = vadd.f32 %v432, %v496
  %v498 = vpop.f32.mrb[0].mxu0
  %499 = vmatprep.mubr.bf16.mxu0 0
  %500 = vmatmul.mubr.bf16.gmra.mrb[0].mxu0 %v457
  %v501 = vpop.f32.mrb[0].mxu0
  %v502 = vadd.f32 %v437, %v501
  %v503 = vpop.f32.mrb[0].mxu0
  %v504 = vpop.f32.mrb[0].mxu0
  %v505 = vadd.f32 %v440, %v504
  %v506 = vpop.f32.mrb[0].mxu0
  %507 = vdwg.mxu0
  %v508 = vld [vmem:[%s3 + $0x20] sm:$0xf]
  %v509 = vld [vmem:[%s3 + $0x24] sm:$0xf]
  %v510 = vld [vmem:[%s3 + $0x28] sm:$0xf]
  %v511 = vld [vmem:[%s3 + $0x2c] sm:$0xf]
  %v516 = vunpack.c.l.b16 %v508
  %v517 = vunpack.c.l.b16 %v509
  %v518 = vunpack.c.l.b16 %v510
  %v519 = vunpack.c.l.b16 %v511
  %v520 = vpack.c.b16 %v517, %v516
  %v521 = vpack.c.b16 %v519, %v518
  %v523 = vsel %vm387, %v520, 0
  %v526 = vsel %vm387, %v521, 0
  %528 = vmatprep.subr.bf16.mxu0 0
  %529 = vmatpush1.bf16.msra.mxu0 %v353
  %530 = vmatprep.subr.bf16.mxu0 0
  %531 = vmatpush1.bf16.msra.mxu0 %v362
  %532 = vmatprep.subr.bf16.mxu0 0
  %533 = vmatpush1.bf16.msra.mxu0 0
  %534 = vmatprep.subr.bf16.mxu0 0
  %535 = vmatpush1.bf16.msra.mxu0 0
  %536 = vmatprep.subr.bf16.mxu0 0
  %537 = vmatpush1.bf16.msra.mxu0 0
  %538 = vmatprep.subr.bf16.mxu0 0
  %539 = vmatpush1.bf16.msra.mxu0 0
  %540 = vmatprep.subr.bf16.mxu0 0
  %541 = vmatpush1.bf16.msra.mxu0 0
  %542 = vmatprep.subr.bf16.mxu0 0
  %543 = vmatpush1.bf16.msra.mxu0 0
  %544 = vmatprep.subr.bf16.mxu0 0
  %545 = vmatpush1.bf16.msra.mxu0 0
  %546 = vmatprep.subr.bf16.mxu0 0
  %547 = vmatpush1.bf16.msra.mxu0 0
  %548 = vmatprep.subr.bf16.mxu0 0
  %549 = vmatpush1.bf16.msra.mxu0 0
  %550 = vmatprep.subr.bf16.mxu0 0
  %551 = vmatpush1.bf16.msra.mxu0 0
  %552 = vmatprep.subr.bf16.mxu0 0
  %553 = vmatpush1.bf16.msra.mxu0 0
  %554 = vmatprep.subr.bf16.mxu0 0
  %555 = vmatpush1.bf16.msra.mxu0 0
  %556 = vmatprep.subr.bf16.mxu0 0
  %557 = vmatpush1.bf16.msra.mxu0 0
  %558 = vmatprep.subr.bf16.mxu0 0
  %559 = vmatpush1.bf16.msra.mxu0 0
  %560 = vmatprep.mubr.bf16.mxu0 0
  %561 = vmatmul.mubr.bf16.gmra.mrb[0].mxu0 %v523
  %v562 = vpop.f32.mrb[0].mxu0
  %v563 = vadd.f32 0.0, %v562
  %v564 = vpop.f32.mrb[0].mxu0
  %v565 = vpop.f32.mrb[0].mxu0
  %v566 = vadd.f32 0.0, %v565
  %v567 = vpop.f32.mrb[0].mxu0
  %568 = vmatprep.mubr.bf16.mxu0 0
  %569 = vmatmul.mubr.bf16.gmra.mrb[0].mxu0 %v526
  %v570 = vpop.f32.mrb[0].mxu0
  %v571 = vadd.f32 0.0, %v570
  %v572 = vpop.f32.mrb[0].mxu0
  %v573 = vpop.f32.mrb[0].mxu0
  %v574 = vadd.f32 0.0, %v573
  %v575 = vpop.f32.mrb[0].mxu0
  %576 = vdwg.mxu0
  %v577 = vadd.f32 %v494, %v563
  %v578 = vadd.f32 %v497, %v566
  %v579 = vadd.f32 %v502, %v571
  %v580 = vadd.f32 %v505, %v574
  %v581 = vld [vmem:[%s4] sm:$0x1]
  %v582 = vlaneseq
  %v583 = vshrl.u32 %v582, 7
  %v584 = vsub.s32 0, %v583
  %v585 = vrot.slane %v581, %v584
  %v586 = vadd.f32 %v577, %v585
  %v587 = vadd.f32 %v578, %v585
  %v588 = vadd.f32 %v579, %v585
  %v589 = vadd.f32 %v580, %v585
  %vm590 = vcmp.ge.f32.partialorder %v586, 0.0
  %vm591 = vcmp.ge.f32.partialorder %v587, 0.0
  %vm592 = vcmp.ge.f32.partialorder %v588, 0.0
  %vm593 = vcmp.ge.f32.partialorder %v589, 0.0
  %v594 = vmul.f32 %v586, 0.2
  %v595 = vmul.f32 %v587, 0.2
  %v596 = vmul.f32 %v588, 0.2
  %v597 = vmul.f32 %v589, 0.2
  %v598 = vsel %vm590, %v586, %v594
  %v599 = vsel %vm591, %v587, %v595
  %v600 = vsel %vm592, %v588, %v596
  %v601 = vsel %vm593, %v589, %v597
  %v602 = vpack.c.bf16 %v599, %v598
  %v603 = vpack.c.bf16 %v601, %v600
  %v604 = vld [vmem:[%s2] sm:$0xff]
  %v605 = vld [vmem:[%s2 + $0x8] sm:$0xf]
  %v606 = vld [vmem:[%s2 + $0xc] sm:$0xff]
  %v607 = vld [vmem:[%s2 + $0x14] sm:$0xf]
  %v608 = vld [vmem:[%s2 + $0x18] sm:$0xff]
  %v609 = vld [vmem:[%s2 + $0x20] sm:$0xf]
  %v610 = vld [vmem:[%s2 + $0x24] sm:$0xff]
  %v611 = vld [vmem:[%s2 + $0x2c] sm:$0xf]
  %v612 = vld [vmem:[%s2 + $0x30] sm:$0xff]
  %v613 = vld [vmem:[%s2 + $0x38] sm:$0xf]
  %v614 = vld [vmem:[%s2 + $0x3c] sm:$0xff]
  %v615 = vld [vmem:[%s2 + $0x44] sm:$0xf]
  %v616 = vld [vmem:[%s2 + $0x48] sm:$0xff]
  %v617 = vld [vmem:[%s2 + $0x50] sm:$0xf]
  %v618 = vld [vmem:[%s2 + $0x54] sm:$0xff]
  %v619 = vld [vmem:[%s2 + $0x5c] sm:$0xf]
  %v620 = vld [vmem:[%s2 + $0x60] sm:$0xff]
  %v621 = vld [vmem:[%s2 + $0x68] sm:$0xf]
  %v622 = vld [vmem:[%s2 + $0x6c] sm:$0xff]
  %v623 = vld [vmem:[%s2 + $0x74] sm:$0xf]
  %v624 = vld [vmem:[%s2 + $0x78] sm:$0xff]
  %v625 = vld [vmem:[%s2 + $0x80] sm:$0xf]
  %v626 = vld [vmem:[%s2 + $0x84] sm:$0xff]
  %v627 = vld [vmem:[%s2 + $0x8c] sm:$0xf]
  %v628 = vld [vmem:[%s2 + $0x90] sm:$0xff]
  %v629 = vld [vmem:[%s2 + $0x98] sm:$0xf]
  %v630 = vld [vmem:[%s2 + $0x9c] sm:$0xff]
  %v631 = vld [vmem:[%s2 + $0xa4] sm:$0xf]
  %v632 = vld [vmem:[%s2 + $0xa8] sm:$0xff]
  %v633 = vld [vmem:[%s2 + $0xb0] sm:$0xf]
  %v634 = vld [vmem:[%s2 + $0xb4] sm:$0xff]
  %v635 = vld [vmem:[%s2 + $0xbc] sm:$0xf]
  %v668 = vunpack.c.l.b16 %v604
  %v669 = vunpack.c.h.b16 %v604
  %v670 = vunpack.c.l.b16 %v605
  %v671 = vunpack.c.l.b16 %v606
  %v672 = vunpack.c.h.b16 %v606
  %v673 = vunpack.c.l.b16 %v607
  %v674 = vunpack.c.l.b16 %v608
  %v675 = vunpack.c.h.b16 %v608
  %v676 = vunpack.c.l.b16 %v609
  %v677 = vunpack.c.l.b16 %v610
  %v678 = vunpack.c.h.b16 %v610
  %v679 = vunpack.c.l.b16 %v611
  %v680 = vunpack.c.l.b16 %v612
  %v681 = vunpack.c.h.b16 %v612
  %v682 = vunpack.c.l.b16 %v613
  %v683 = vunpack.c.l.b16 %v614
  %v684 = vunpack.c.h.b16 %v614
  %v685 = vunpack.c.l.b16 %v615
  %v686 = vunpack.c.l.b16 %v616
  %v687 = vunpack.c.h.b16 %v616
  %v688 = vunpack.c.l.b16 %v617
  %v689 = vunpack.c.l.b16 %v618
  %v690 = vunpack.c.h.b16 %v618
  %v691 = vunpack.c.l.b16 %v619
  %v692 = vunpack.c.l.b16 %v620
  %v693 = vunpack.c.h.b16 %v620
  %v694 = vunpack.c.l.b16 %v621
  %v695 = vunpack.c.l.b16 %v622
  %v696 = vunpack.c.h.b16 %v622
  %v697 = vunpack.c.l.b16 %v623
  %v698 = vunpack.c.l.b16 %v624
  %v699 = vunpack.c.h.b16 %v624
  %v700 = vunpack.c.l.b16 %v625
  %v701 = vunpack.c.l.b16 %v626
  %v702 = vunpack.c.h.b16 %v626
  %v703 = vunpack.c.l.b16 %v627
  %v704 = vunpack.c.l.b16 %v628
  %v705 = vunpack.c.h.b16 %v628
  %v706 = vunpack.c.l.b16 %v629
  %v707 = vunpack.c.l.b16 %v630
  %v708 = vunpack.c.h.b16 %v630
  %v709 = vunpack.c.l.b16 %v631
  %v710 = vunpack.c.l.b16 %v632
  %v711 = vunpack.c.h.b16 %v632
  %v712 = vunpack.c.l.b16 %v633
  %v713 = vunpack.c.l.b16 %v634
  %v714 = vunpack.c.h.b16 %v634
  %v715 = vunpack.c.l.b16 %v635
  %v716 = vpack.c.b16 %v671, %v668
  %v717 = vpack.c.b16 %v672, %v669
  %v718 = vpack.c.b16 %v673, %v670
  %v719 = vpack.c.b16 %v677, %v674
  %v720 = vpack.c.b16 %v678, %v675
  %v721 = vpack.c.b16 %v679, %v676
  %v722 = vpack.c.b16 %v683, %v680
  %v723 = vpack.c.b16 %v684, %v681
  %v724 = vpack.c.b16 %v685, %v682
  %v725 = vpack.c.b16 %v689, %v686
  %v726 = vpack.c.b16 %v690, %v687
  %v727 = vpack.c.b16 %v691, %v688
  %v728 = vpack.c.b16 %v695, %v692
  %v729 = vpack.c.b16 %v696, %v693
  %v730 = vpack.c.b16 %v697, %v694
  %v731 = vpack.c.b16 %v701, %v698
  %v732 = vpack.c.b16 %v702, %v699
  %v733 = vpack.c.b16 %v703, %v700
  %v734 = vpack.c.b16 %v707, %v704
  %v735 = vpack.c.b16 %v708, %v705
  %v736 = vpack.c.b16 %v709, %v706
  %v737 = vpack.c.b16 %v713, %v710
  %v738 = vpack.c.b16 %v714, %v711
  %v739 = vpack.c.b16 %v715, %v712
  %764 = vmatprep.subr.bf16.mxu0 %v717
  %765 = vmatpush1.bf16.msra.mxu0 %v716
  %766 = vmatprep.subr.bf16.mxu0 %v720
  %767 = vmatpush1.bf16.msra.mxu0 %v719
  %768 = vmatprep.subr.bf16.mxu0 %v723
  %769 = vmatpush1.bf16.msra.mxu0 %v722
  %770 = vmatprep.subr.bf16.mxu0 %v726
  %771 = vmatpush1.bf16.msra.mxu0 %v725
  %772 = vmatprep.subr.bf16.mxu0 %v729
  %773 = vmatpush1.bf16.msra.mxu0 %v728
  %774 = vmatprep.subr.bf16.mxu0 %v732
  %775 = vmatpush1.bf16.msra.mxu0 %v731
  %776 = vmatprep.subr.bf16.mxu0 %v735
  %777 = vmatpush1.bf16.msra.mxu0 %v734
  %778 = vmatprep.subr.bf16.mxu0 %v738
  %779 = vmatpush1.bf16.msra.mxu0 %v737
  %780 = vmatprep.subr.bf16.mxu0 0
  %781 = vmatpush1.bf16.msra.mxu0 0
  %782 = vmatprep.subr.bf16.mxu0 0
  %783 = vmatpush1.bf16.msra.mxu0 0
  %784 = vmatprep.subr.bf16.mxu0 0
  %785 = vmatpush1.bf16.msra.mxu0 0
  %786 = vmatprep.subr.bf16.mxu0 0
  %787 = vmatpush1.bf16.msra.mxu0 0
  %788 = vmatprep.subr.bf16.mxu0 0
  %789 = vmatpush1.bf16.msra.mxu0 0
  %790 = vmatprep.subr.bf16.mxu0 0
  %791 = vmatpush1.bf16.msra.mxu0 0
  %792 = vmatprep.subr.bf16.mxu0 0
  %793 = vmatpush1.bf16.msra.mxu0 0
  %794 = vmatprep.subr.bf16.mxu0 0
  %795 = vmatpush1.bf16.msra.mxu0 0
  %796 = vmatprep.mubr.bf16.mxu0 0
  %797 = vmatmul.mubr.bf16.gmra.mrb[0].mxu0 %v602
  %v798 = vpop.f32.mrb[0].mxu0
  %v799 = vadd.f32 0.0, %v798
  %v800 = vpop.f32.mrb[0].mxu0
  %v801 = vadd.f32 0.0, %v800
  %v802 = vpop.f32.mrb[0].mxu0
  %v803 = vadd.f32 0.0, %v802
  %v804 = vpop.f32.mrb[0].mxu0
  %v805 = vadd.f32 0.0, %v804
  %806 = vmatprep.mubr.bf16.mxu0 0
  %807 = vmatmul.mubr.bf16.gmra.mrb[0].mxu0 %v603
  %v808 = vpop.f32.mrb[0].mxu0
  %v809 = vadd.f32 0.0, %v808
  %v810 = vpop.f32.mrb[0].mxu0
  %v811 = vadd.f32 0.0, %v810
  %v812 = vpop.f32.mrb[0].mxu0
  %v813 = vadd.f32 0.0, %v812
  %v814 = vpop.f32.mrb[0].mxu0
  %v815 = vadd.f32 0.0, %v814
  %816 = vdwg.mxu0
  %817 = vmatprep.subr.bf16.mxu0 0
  %818 = vmatpush1.bf16.msra.mxu0 %v718
  %819 = vmatprep.subr.bf16.mxu0 0
  %820 = vmatpush1.bf16.msra.mxu0 %v721
  %821 = vmatprep.subr.bf16.mxu0 0
  %822 = vmatpush1.bf16.msra.mxu0 %v724
  %823 = vmatprep.subr.bf16.mxu0 0
  %824 = vmatpush1.bf16.msra.mxu0 %v727
  %825 = vmatprep.subr.bf16.mxu0 0
  %826 = vmatpush1.bf16.msra.mxu0 %v730
  %827 = vmatprep.subr.bf16.mxu0 0
  %828 = vmatpush1.bf16.msra.mxu0 %v733
  %829 = vmatprep.subr.bf16.mxu0 0
  %830 = vmatpush1.bf16.msra.mxu0 %v736
  %831 = vmatprep.subr.bf16.mxu0 0
  %832 = vmatpush1.bf16.msra.mxu0 %v739
  %833 = vmatprep.subr.bf16.mxu0 0
  %834 = vmatpush1.bf16.msra.mxu0 0
  %835 = vmatprep.subr.bf16.mxu0 0
  %836 = vmatpush1.bf16.msra.mxu0 0
  %837 = vmatprep.subr.bf16.mxu0 0
  %838 = vmatpush1.bf16.msra.mxu0 0
  %839 = vmatprep.subr.bf16.mxu0 0
  %840 = vmatpush1.bf16.msra.mxu0 0
  %841 = vmatprep.subr.bf16.mxu0 0
  %842 = vmatpush1.bf16.msra.mxu0 0
  %843 = vmatprep.subr.bf16.mxu0 0
  %844 = vmatpush1.bf16.msra.mxu0 0
  %845 = vmatprep.subr.bf16.mxu0 0
  %846 = vmatpush1.bf16.msra.mxu0 0
  %847 = vmatprep.subr.bf16.mxu0 0
  %848 = vmatpush1.bf16.msra.mxu0 0
  %849 = vmatprep.mubr.bf16.mxu0 0
  %850 = vmatmul.mubr.bf16.gmra.mrb[0].mxu0 %v602
  %v851 = vpop.f32.mrb[0].mxu0
  %v852 = vadd.f32 0.0, %v851
  %v853 = vpop.f32.mrb[0].mxu0
  %v854 = vpop.f32.mrb[0].mxu0
  %v855 = vadd.f32 0.0, %v854
  %v856 = vpop.f32.mrb[0].mxu0
  %857 = vmatprep.mubr.bf16.mxu0 0
  %858 = vmatmul.mubr.bf16.gmra.mrb[0].mxu0 %v603
  %v859 = vpop.f32.mrb[0].mxu0
  %v860 = vadd.f32 0.0, %v859
  %v861 = vpop.f32.mrb[0].mxu0
  %v862 = vpop.f32.mrb[0].mxu0
  %v863 = vadd.f32 0.0, %v862
  %v864 = vpop.f32.mrb[0].mxu0
  %865 = vdwg.mxu0
  %v866 = vpack.c.bf16 %v803, %v799
  %v867 = vpack.c.bf16 %v805, %v801
  %v868 = vpack.c.bf16 %v855, %v852
  %v869 = vpack.c.bf16 %v813, %v809
  %v870 = vpack.c.bf16 %v815, %v811
  %v871 = vpack.c.bf16 %v863, %v860
  %v872 = vld [vmem:[%s3 + $0x30] sm:$0xf]
  %v873 = vld [vmem:[%s3 + $0x34] sm:$0xf]
  %v874 = vld [vmem:[%s3 + $0x38] sm:$0xf]
  %v875 = vld [vmem:[%s3 + $0x3c] sm:$0xf]
  %v878 = vunpack.c.l.b16 %v874
  %v879 = vunpack.c.l.b16 %v875
  %v880 = vpack.c.b16 %v879, %v878
  %v882 = vsel %vm387, %v880, 0
  %884 = vmatprep.subr.bf16.mxu0 0
  %885 = vmatpush1.bf16.msra.mxu0 %v867
  %886 = vmatprep.subr.bf16.mxu0 0
  %887 = vmatpush1.bf16.msra.mxu0 %v870
  %888 = vmatprep.subr.bf16.mxu0 0
  %889 = vmatpush1.bf16.msra.mxu0 0
  %890 = vmatprep.subr.bf16.mxu0 0
  %891 = vmatpush1.bf16.msra.mxu0 0
  %892 = vmatprep.subr.bf16.mxu0 0
  %893 = vmatpush1.bf16.msra.mxu0 0
  %894 = vmatprep.subr.bf16.mxu0 0
  %895 = vmatpush1.bf16.msra.mxu0 0
  %896 = vmatprep.subr.bf16.mxu0 0
  %897 = vmatpush1.bf16.msra.mxu0 0
  %898 = vmatprep.subr.bf16.mxu0 0
  %899 = vmatpush1.bf16.msra.mxu0 0
  %900 = vmatprep.subr.bf16.mxu0 0
  %901 = vmatpush1.bf16.msra.mxu0 0
  %902 = vmatprep.subr.bf16.mxu0 0
  %903 = vmatpush1.bf16.msra.mxu0 0
  %904 = vmatprep.subr.bf16.mxu0 0
  %905 = vmatpush1.bf16.msra.mxu0 0
  %906 = vmatprep.subr.bf16.mxu0 0
  %907 = vmatpush1.bf16.msra.mxu0 0
  %908 = vmatprep.subr.bf16.mxu0 0
  %909 = vmatpush1.bf16.msra.mxu0 0
  %910 = vmatprep.subr.bf16.mxu0 0
  %911 = vmatpush1.bf16.msra.mxu0 0
  %912 = vmatprep.subr.bf16.mxu0 0
  %913 = vmatpush1.bf16.msra.mxu0 0
  %914 = vmatprep.subr.bf16.mxu0 0
  %915 = vmatpush1.bf16.msra.mxu0 0
  %916 = vmatprep.mubr.bf16.mxu0 0
  %917 = vmatmul.mubr.bf16.gmra.mrb[0].mxu0 %v882
  %v918 = vpop.f32.mrb[0].mxu0
  %v919 = vadd.f32 0.0, %v918
  %v920 = vpop.f32.mrb[0].mxu0
  %v921 = vpop.f32.mrb[0].mxu0
  %v922 = vadd.f32 0.0, %v921
  %v923 = vpop.f32.mrb[0].mxu0
  %924 = vdwg.mxu0
  %v927 = vunpack.c.l.b16 %v872
  %v928 = vunpack.c.l.b16 %v873
  %v929 = vpack.c.b16 %v928, %v927
  %v931 = vsel %vm387, %v929, 0
  %933 = vmatprep.subr.bf16.mxu0 0
  %934 = vmatpush1.bf16.msra.mxu0 %v866
  %935 = vmatprep.subr.bf16.mxu0 0
  %936 = vmatpush1.bf16.msra.mxu0 %v869
  %937 = vmatprep.subr.bf16.mxu0 0
  %938 = vmatpush1.bf16.msra.mxu0 0
  %939 = vmatprep.subr.bf16.mxu0 0
  %940 = vmatpush1.bf16.msra.mxu0 0
  %941 = vmatprep.subr.bf16.mxu0 0
  %942 = vmatpush1.bf16.msra.mxu0 0
  %943 = vmatprep.subr.bf16.mxu0 0
  %944 = vmatpush1.bf16.msra.mxu0 0
  %945 = vmatprep.subr.bf16.mxu0 0
  %946 = vmatpush1.bf16.msra.mxu0 0
  %947 = vmatprep.subr.bf16.mxu0 0
  %948 = vmatpush1.bf16.msra.mxu0 0
  %949 = vmatprep.subr.bf16.mxu0 0
  %950 = vmatpush1.bf16.msra.mxu0 0
  %951 = vmatprep.subr.bf16.mxu0 0
  %952 = vmatpush1.bf16.msra.mxu0 0
  %953 = vmatprep.subr.bf16.mxu0 0
  %954 = vmatpush1.bf16.msra.mxu0 0
  %955 = vmatprep.subr.bf16.mxu0 0
  %956 = vmatpush1.bf16.msra.mxu0 0
  %957 = vmatprep.subr.bf16.mxu0 0
  %958 = vmatpush1.bf16.msra.mxu0 0
  %959 = vmatprep.subr.bf16.mxu0 0
  %960 = vmatpush1.bf16.msra.mxu0 0
  %961 = vmatprep.subr.bf16.mxu0 0
  %962 = vmatpush1.bf16.msra.mxu0 0
  %963 = vmatprep.subr.bf16.mxu0 0
  %964 = vmatpush1.bf16.msra.mxu0 0
  %965 = vmatprep.mubr.bf16.mxu0 0
  %966 = vmatmul.mubr.bf16.gmra.mrb[0].mxu0 %v931
  %v967 = vpop.f32.mrb[0].mxu0
  %v968 = vadd.f32 %v919, %v967
  %v969 = vpop.f32.mrb[0].mxu0
  %v970 = vpop.f32.mrb[0].mxu0
  %v971 = vadd.f32 %v922, %v970
  %v972 = vpop.f32.mrb[0].mxu0
  %973 = vdwg.mxu0
  %v974 = vld [vmem:[%s3 + $0x40] sm:$0xf]
  %v975 = vld [vmem:[%s3 + $0x44] sm:$0xf]
  %v978 = vunpack.c.l.b16 %v974
  %v979 = vunpack.c.l.b16 %v975
  %v980 = vpack.c.b16 %v979, %v978
  %v982 = vsel %vm387, %v980, 0
  %984 = vmatprep.subr.bf16.mxu0 0
  %985 = vmatpush1.bf16.msra.mxu0 %v868
  %986 = vmatprep.subr.bf16.mxu0 0
  %987 = vmatpush1.bf16.msra.mxu0 %v871
  %988 = vmatprep.subr.bf16.mxu0 0
  %989 = vmatpush1.bf16.msra.mxu0 0
  %990 = vmatprep.subr.bf16.mxu0 0
  %991 = vmatpush1.bf16.msra.mxu0 0
  %992 = vmatprep.subr.bf16.mxu0 0
  %993 = vmatpush1.bf16.msra.mxu0 0
  %994 = vmatprep.subr.bf16.mxu0 0
  %995 = vmatpush1.bf16.msra.mxu0 0
  %996 = vmatprep.subr.bf16.mxu0 0
  %997 = vmatpush1.bf16.msra.mxu0 0
  %998 = vmatprep.subr.bf16.mxu0 0
  %999 = vmatpush1.bf16.msra.mxu0 0
  %1000 = vmatprep.subr.bf16.mxu0 0
  %1001 = vmatpush1.bf16.msra.mxu0 0
  %1002 = vmatprep.subr.bf16.mxu0 0
  %1003 = vmatpush1.bf16.msra.mxu0 0
  %1004 = vmatprep.subr.bf16.mxu0 0
  %1005 = vmatpush1.bf16.msra.mxu0 0
  %1006 = vmatprep.subr.bf16.mxu0 0
  %1007 = vmatpush1.bf16.msra.mxu0 0
  %1008 = vmatprep.subr.bf16.mxu0 0
  %1009 = vmatpush1.bf16.msra.mxu0 0
  %1010 = vmatprep.subr.bf16.mxu0 0
  %1011 = vmatpush1.bf16.msra.mxu0 0
  %1012 = vmatprep.subr.bf16.mxu0 0
  %1013 = vmatpush1.bf16.msra.mxu0 0
  %1014 = vmatprep.subr.bf16.mxu0 0
  %1015 = vmatpush1.bf16.msra.mxu0 0
  %1016 = vmatprep.mubr.bf16.mxu0 0
  %1017 = vmatmul.mubr.bf16.gmra.mrb[0].mxu0 %v982
  %v1018 = vpop.f32.mrb[0].mxu0
  %v1019 = vadd.f32 0.0, %v1018
  %v1020 = vpop.f32.mrb[0].mxu0
  %v1021 = vpop.f32.mrb[0].mxu0
  %v1022 = vadd.f32 0.0, %v1021
  %v1023 = vpop.f32.mrb[0].mxu0
  %1024 = vdwg.mxu0
  %v1025 = vadd.f32 %v968, %v1019
  %v1026 = vadd.f32 %v971, %v1022
  %v1027 = vld [vmem:[%s4 + $0x1] sm:$0x1]
  %v1028 = vlaneseq
  %v1029 = vshrl.u32 %v1028, 7
  %v1030 = vsub.s32 0, %v1029
  %v1031 = vrot.slane %v1027, %v1030
  %v1032 = vadd.f32 %v1025, %v1031
  %v1033 = vadd.f32 %v1026, %v1031
  %vm1034 = vcmp.ge.f32.partialorder %v1032, 0.0
  %vm1035 = vcmp.ge.f32.partialorder %v1033, 0.0
  %v1036 = vmul.f32 %v1032, 0.2
  %v1037 = vmul.f32 %v1033, 0.2
  %v1038 = vsel %vm1034, %v1032, %v1036
  %v1039 = vsel %vm1035, %v1033, %v1037
  %1040 = vst [vmem:[%s5] sm:$0xff] %v1038
  %1041 = vst [vmem:[%s5 + $0x8] sm:$0xff] %v1039
  %v1042 = vld [vmem:[%s3 + $0x48] sm:$0xf]
  %v1043 = vld [vmem:[%s3 + $0x4c] sm:$0xf]
  %v1044 = vld [vmem:[%s3 + $0x50] sm:$0xf]
  %v1045 = vld [vmem:[%s3 + $0x54] sm:$0xf]
  %v1048 = vunpack.c.l.b16 %v1044
  %v1049 = vunpack.c.l.b16 %v1045
  %v1050 = vpack.c.b16 %v1049, %v1048
  %v1052 = vsel %vm387, %v1050, 0
  %1054 = vmatprep.subr.bf16.mxu0 0
  %1055 = vmatpush1.bf16.msra.mxu0 %v355
  %1056 = vmatprep.subr.bf16.mxu0 0
  %1057 = vmatpush1.bf16.msra.mxu0 %v364
  %1058 = vmatprep.subr.bf16.mxu0 0
  %1059 = vmatpush1.bf16.msra.mxu0 0
  %1060 = vmatprep.subr.bf16.mxu0 0
  %1061 = vmatpush1.bf16.msra.mxu0 0
  %1062 = vmatprep.subr.bf16.mxu0 0
  %1063 = vmatpush1.bf16.msra.mxu0 0
  %1064 = vmatprep.subr.bf16.mxu0 0
  %1065 = vmatpush1.bf16.msra.mxu0 0
  %1066 = vmatprep.subr.bf16.mxu0 0
  %1067 = vmatpush1.bf16.msra.mxu0 0
  %1068 = vmatprep.subr.bf16.mxu0 0
  %1069 = vmatpush1.bf16.msra.mxu0 0
  %1070 = vmatprep.subr.bf16.mxu0 0
  %1071 = vmatpush1.bf16.msra.mxu0 0
  %1072 = vmatprep.subr.bf16.mxu0 0
  %1073 = vmatpush1.bf16.msra.mxu0 0
  %1074 = vmatprep.subr.bf16.mxu0 0
  %1075 = vmatpush1.bf16.msra.mxu0 0
  %1076 = vmatprep.subr.bf16.mxu0 0
  %1077 = vmatpush1.bf16.msra.mxu0 0
  %1078 = vmatprep.subr.bf16.mxu0 0
  %1079 = vmatpush1.bf16.msra.mxu0 0
  %1080 = vmatprep.subr.bf16.mxu0 0
  %1081 = vmatpush1.bf16.msra.mxu0 0
  %1082 = vmatprep.subr.bf16.mxu0 0
  %1083 = vmatpush1.bf16.msra.mxu0 0
  %1084 = vmatprep.subr.bf16.mxu0 0
  %1085 = vmatpush1.bf16.msra.mxu0 0
  %1086 = vmatprep.mubr.bf16.mxu0 0
  %1087 = vmatmul.mubr.bf16.gmra.mrb[0].mxu0 %v1052
  %v1088 = vpop.f32.mrb[0].mxu0
  %v1089 = vadd.f32 0.0, %v1088
  %v1090 = vpop.f32.mrb[0].mxu0
  %v1091 = vpop.f32.mrb[0].mxu0
  %v1092 = vadd.f32 0.0, %v1091
  %v1093 = vpop.f32.mrb[0].mxu0
  %1094 = vdwg.mxu0
  %v1097 = vunpack.c.l.b16 %v1042
  %v1098 = vunpack.c.l.b16 %v1043
  %v1099 = vpack.c.b16 %v1098, %v1097
  %v1101 = vsel %vm387, %v1099, 0
  %1103 = vmatprep.subr.bf16.mxu0 0
  %1104 = vmatpush1.bf16.msra.mxu0 %v354
  %1105 = vmatprep.subr.bf16.mxu0 0
  %1106 = vmatpush1.bf16.msra.mxu0 %v363
  %1107 = vmatprep.subr.bf16.mxu0 0
  %1108 = vmatpush1.bf16.msra.mxu0 0
  %1109 = vmatprep.subr.bf16.mxu0 0
  %1110 = vmatpush1.bf16.msra.mxu0 0
  %1111 = vmatprep.subr.bf16.mxu0 0
  %1112 = vmatpush1.bf16.msra.mxu0 0
  %1113 = vmatprep.subr.bf16.mxu0 0
  %1114 = vmatpush1.bf16.msra.mxu0 0
  %1115 = vmatprep.subr.bf16.mxu0 0
  %1116 = vmatpush1.bf16.msra.mxu0 0
  %1117 = vmatprep.subr.bf16.mxu0 0
  %1118 = vmatpush1.bf16.msra.mxu0 0
  %1119 = vmatprep.subr.bf16.mxu0 0
  %1120 = vmatpush1.bf16.msra.mxu0 0
  %1121 = vmatprep.subr.bf16.mxu0 0
  %1122 = vmatpush1.bf16.msra.mxu0 0
  %1123 = vmatprep.subr.bf16.mxu0 0
  %1124 = vmatpush1.bf16.msra.mxu0 0
  %1125 = vmatprep.subr.bf16.mxu0 0
  %1126 = vmatpush1.bf16.msra.mxu0 0
  %1127 = vmatprep.subr.bf16.mxu0 0
  %1128 = vmatpush1.bf16.msra.mxu0 0
  %1129 = vmatprep.subr.bf16.mxu0 0
  %1130 = vmatpush1.bf16.msra.mxu0 0
  %1131 = vmatprep.subr.bf16.mxu0 0
  %1132 = vmatpush1.bf16.msra.mxu0 0
  %1133 = vmatprep.subr.bf16.mxu0 0
  %1134 = vmatpush1.bf16.msra.mxu0 0
  %1135 = vmatprep.mubr.bf16.mxu0 0
  %1136 = vmatmul.mubr.bf16.gmra.mrb[0].mxu0 %v1101
  %v1137 = vpop.f32.mrb[0].mxu0
  %v1138 = vadd.f32 %v1089, %v1137
  %v1139 = vpop.f32.mrb[0].mxu0
  %v1140 = vpop.f32.mrb[0].mxu0
  %v1141 = vadd.f32 %v1092, %v1140
  %v1142 = vpop.f32.mrb[0].mxu0
  %1143 = vdwg.mxu0
  %v1144 = vld [vmem:[%s3 + $0x58] sm:$0xf]
  %v1145 = vld [vmem:[%s3 + $0x5c] sm:$0xf]
  %v1148 = vunpack.c.l.b16 %v1144
  %v1149 = vunpack.c.l.b16 %v1145
  %v1150 = vpack.c.b16 %v1149, %v1148
  %v1152 = vsel %vm387, %v1150, 0
  %1154 = vmatprep.subr.bf16.mxu0 0
  %1155 = vmatpush1.bf16.msra.mxu0 %v356
  %1156 = vmatprep.subr.bf16.mxu0 0
  %1157 = vmatpush1.bf16.msra.mxu0 %v365
  %1158 = vmatprep.subr.bf16.mxu0 0
  %1159 = vmatpush1.bf16.msra.mxu0 0
  %1160 = vmatprep.subr.bf16.mxu0 0
  %1161 = vmatpush1.bf16.msra.mxu0 0
  %1162 = vmatprep.subr.bf16.mxu0 0
  %1163 = vmatpush1.bf16.msra.mxu0 0
  %1164 = vmatprep.subr.bf16.mxu0 0
  %1165 = vmatpush1.bf16.msra.mxu0 0
  %1166 = vmatprep.subr.bf16.mxu0 0
  %1167 = vmatpush1.bf16.msra.mxu0 0
  %1168 = vmatprep.subr.bf16.mxu0 0
  %1169 = vmatpush1.bf16.msra.mxu0 0
  %1170 = vmatprep.subr.bf16.mxu0 0
  %1171 = vmatpush1.bf16.msra.mxu0 0
  %1172 = vmatprep.subr.bf16.mxu0 0
  %1173 = vmatpush1.bf16.msra.mxu0 0
  %1174 = vmatprep.subr.bf16.mxu0 0
  %1175 = vmatpush1.bf16.msra.mxu0 0
  %1176 = vmatprep.subr.bf16.mxu0 0
  %1177 = vmatpush1.bf16.msra.mxu0 0
  %1178 = vmatprep.subr.bf16.mxu0 0
  %1179 = vmatpush1.bf16.msra.mxu0 0
  %1180 = vmatprep.subr.bf16.mxu0 0
  %1181 = vmatpush1.bf16.msra.mxu0 0
  %1182 = vmatprep.subr.bf16.mxu0 0
  %1183 = vmatpush1.bf16.msra.mxu0 0
  %1184 = vmatprep.subr.bf16.mxu0 0
  %1185 = vmatpush1.bf16.msra.mxu0 0
  %1186 = vmatprep.mubr.bf16.mxu0 0
  %1187 = vmatmul.mubr.bf16.gmra.mrb[0].mxu0 %v1152
  %v1188 = vpop.f32.mrb[0].mxu0
  %v1189 = vadd.f32 0.0, %v1188
  %v1190 = vpop.f32.mrb[0].mxu0
  %v1191 = vpop.f32.mrb[0].mxu0
  %v1192 = vadd.f32 0.0, %v1191
  %v1193 = vpop.f32.mrb[0].mxu0
  %1194 = vdwg.mxu0
  %v1195 = vadd.f32 %v1138, %v1189
  %v1196 = vadd.f32 %v1141, %v1192
  %v1197 = vld [vmem:[%s4 + $0x2] sm:$0x1]
  %v1198 = vlaneseq
  %v1199 = vshrl.u32 %v1198, 7
  %v1200 = vsub.s32 0, %v1199
  %v1201 = vrot.slane %v1197, %v1200
  %v1202 = vadd.f32 %v1195, %v1201
  %v1203 = vadd.f32 %v1196, %v1201
  %vm1204 = vcmp.ge.f32.partialorder %v1202, 0.0
  %vm1205 = vcmp.ge.f32.partialorder %v1203, 0.0
  %v1206 = vmul.f32 %v1202, 0.2
  %v1207 = vmul.f32 %v1203, 0.2
  %v1208 = vsel %vm1204, %v1202, %v1206
  %v1209 = vsel %vm1205, %v1203, %v1207
  %v1210 = vadd.f32 %v1208, %v1038
  %v1211 = vadd.f32 %v1209, %v1039
  %v1212 = vpack.c.bf16 %v1211, %v1210
  %v1213 = vld [vmem:[%s2 + $0xc0] sm:$0xff]
  %v1214 = vld [vmem:[%s2 + $0xc8] sm:$0xf]
  %v1215 = vld [vmem:[%s2 + $0xcc] sm:$0xff]
  %v1216 = vld [vmem:[%s2 + $0xd4] sm:$0xf]
  %v1217 = vld [vmem:[%s2 + $0xd8] sm:$0xff]
  %v1218 = vld [vmem:[%s2 + $0xe0] sm:$0xf]
  %v1219 = vld [vmem:[%s2 + $0xe4] sm:$0xff]
  %v1220 = vld [vmem:[%s2 + $0xec] sm:$0xf]
  %v1221 = vld [vmem:[%s2 + $0xf0] sm:$0xff]
  %v1222 = vld [vmem:[%s2 + $0xf8] sm:$0xf]
  %v1223 = vld [vmem:[%s2 + $0xfc] sm:$0xff]
  %v1224 = vld [vmem:[%s2 + $0x104] sm:$0xf]
  %v1225 = vld [vmem:[%s2 + $0x108] sm:$0xff]
  %v1226 = vld [vmem:[%s2 + $0x110] sm:$0xf]
  %v1227 = vld [vmem:[%s2 + $0x114] sm:$0xff]
  %v1228 = vld [vmem:[%s2 + $0x11c] sm:$0xf]
  %v1229 = vld [vmem:[%s2 + $0x120] sm:$0xff]
  %v1230 = vld [vmem:[%s2 + $0x128] sm:$0xf]
  %v1231 = vld [vmem:[%s2 + $0x12c] sm:$0xff]
  %v1232 = vld [vmem:[%s2 + $0x134] sm:$0xf]
  %v1233 = vld [vmem:[%s2 + $0x138] sm:$0xff]
  %v1234 = vld [vmem:[%s2 + $0x140] sm:$0xf]
  %v1235 = vld [vmem:[%s2 + $0x144] sm:$0xff]
  %v1236 = vld [vmem:[%s2 + $0x14c] sm:$0xf]
  %v1237 = vld [vmem:[%s2 + $0x150] sm:$0xff]
  %v1238 = vld [vmem:[%s2 + $0x158] sm:$0xf]
  %v1239 = vld [vmem:[%s2 + $0x15c] sm:$0xff]
  %v1240 = vld [vmem:[%s2 + $0x164] sm:$0xf]
  %v1241 = vld [vmem:[%s2 + $0x168] sm:$0xff]
  %v1242 = vld [vmem:[%s2 + $0x170] sm:$0xf]
  %v1243 = vld [vmem:[%s2 + $0x174] sm:$0xff]
  %v1244 = vld [vmem:[%s2 + $0x17c] sm:$0xf]
  %v1277 = vunpack.c.l.b16 %v1213
  %v1278 = vunpack.c.h.b16 %v1213
  %v1279 = vunpack.c.l.b16 %v1214
  %v1280 = vunpack.c.l.b16 %v1215
  %v1281 = vunpack.c.h.b16 %v1215
  %v1282 = vunpack.c.l.b16 %v1216
  %v1283 = vunpack.c.l.b16 %v1217
  %v1284 = vunpack.c.h.b16 %v1217
  %v1285 = vunpack.c.l.b16 %v1218
  %v1286 = vunpack.c.l.b16 %v1219
  %v1287 = vunpack.c.h.b16 %v1219
  %v1288 = vunpack.c.l.b16 %v1220
  %v1289 = vunpack.c.l.b16 %v1221
  %v1290 = vunpack.c.h.b16 %v1221
  %v1291 = vunpack.c.l.b16 %v1222
  %v1292 = vunpack.c.l.b16 %v1223
  %v1293 = vunpack.c.h.b16 %v1223
  %v1294 = vunpack.c.l.b16 %v1224
  %v1295 = vunpack.c.l.b16 %v1225
  %v1296 = vunpack.c.h.b16 %v1225
  %v1297 = vunpack.c.l.b16 %v1226
  %v1298 = vunpack.c.l.b16 %v1227
  %v1299 = vunpack.c.h.b16 %v1227
  %v1300 = vunpack.c.l.b16 %v1228
  %v1301 = vunpack.c.l.b16 %v1229
  %v1302 = vunpack.c.h.b16 %v1229
  %v1303 = vunpack.c.l.b16 %v1230
  %v1304 = vunpack.c.l.b16 %v1231
  %v1305 = vunpack.c.h.b16 %v1231
  %v1306 = vunpack.c.l.b16 %v1232
  %v1307 = vunpack.c.l.b16 %v1233
  %v1308 = vunpack.c.h.b16 %v1233
  %v1309 = vunpack.c.l.b16 %v1234
  %v1310 = vunpack.c.l.b16 %v1235
  %v1311 = vunpack.c.h.b16 %v1235
  %v1312 = vunpack.c.l.b16 %v1236
  %v1313 = vunpack.c.l.b16 %v1237
  %v1314 = vunpack.c.h.b16 %v1237
  %v1315 = vunpack.c.l.b16 %v1238
  %v1316 = vunpack.c.l.b16 %v1239
  %v1317 = vunpack.c.h.b16 %v1239
  %v1318 = vunpack.c.l.b16 %v1240
  %v1319 = vunpack.c.l.b16 %v1241
  %v1320 = vunpack.c.h.b16 %v1241
  %v1321 = vunpack.c.l.b16 %v1242
  %v1322 = vunpack.c.l.b16 %v1243
  %v1323 = vunpack.c.h.b16 %v1243
  %v1324 = vunpack.c.l.b16 %v1244
  %v1325 = vpack.c.b16 %v1280, %v1277
  %v1326 = vpack.c.b16 %v1281, %v1278
  %v1327 = vpack.c.b16 %v1282, %v1279
  %v1328 = vpack.c.b16 %v1286, %v1283
  %v1329 = vpack.c.b16 %v1287, %v1284
  %v1330 = vpack.c.b16 %v1288, %v1285
  %v1331 = vpack.c.b16 %v1292, %v1289
  %v1332 = vpack.c.b16 %v1293, %v1290
  %v1333 = vpack.c.b16 %v1294, %v1291
  %v1334 = vpack.c.b16 %v1298, %v1295
  %v1335 = vpack.c.b16 %v1299, %v1296
  %v1336 = vpack.c.b16 %v1300, %v1297
  %v1337 = vpack.c.b16 %v1304, %v1301
  %v1338 = vpack.c.b16 %v1305, %v1302
  %v1339 = vpack.c.b16 %v1306, %v1303
  %v1340 = vpack.c.b16 %v1310, %v1307
  %v1341 = vpack.c.b16 %v1311, %v1308
  %v1342 = vpack.c.b16 %v1312, %v1309
  %v1343 = vpack.c.b16 %v1316, %v1313
  %v1344 = vpack.c.b16 %v1317, %v1314
  %v1345 = vpack.c.b16 %v1318, %v1315
  %v1346 = vpack.c.b16 %v1322, %v1319
  %v1347 = vpack.c.b16 %v1323, %v1320
  %v1348 = vpack.c.b16 %v1324, %v1321
  %1373 = vmatprep.subr.bf16.mxu0 %v1326
  %1374 = vmatpush1.bf16.msra.mxu0 %v1325
  %1375 = vmatprep.subr.bf16.mxu0 %v1329
  %1376 = vmatpush1.bf16.msra.mxu0 %v1328
  %1377 = vmatprep.subr.bf16.mxu0 %v1332
  %1378 = vmatpush1.bf16.msra.mxu0 %v1331
  %1379 = vmatprep.subr.bf16.mxu0 %v1335
  %1380 = vmatpush1.bf16.msra.mxu0 %v1334
  %1381 = vmatprep.subr.bf16.mxu0 %v1338
  %1382 = vmatpush1.bf16.msra.mxu0 %v1337
  %1383 = vmatprep.subr.bf16.mxu0 %v1341
  %1384 = vmatpush1.bf16.msra.mxu0 %v1340
  %1385 = vmatprep.subr.bf16.mxu0 %v1344
  %1386 = vmatpush1.bf16.msra.mxu0 %v1343
  %1387 = vmatprep.subr.bf16.mxu0 %v1347
  %1388 = vmatpush1.bf16.msra.mxu0 %v1346
  %1389 = vmatprep.subr.bf16.mxu0 0
  %1390 = vmatpush1.bf16.msra.mxu0 0
  %1391 = vmatprep.subr.bf16.mxu0 0
  %1392 = vmatpush1.bf16.msra.mxu0 0
  %1393 = vmatprep.subr.bf16.mxu0 0
  %1394 = vmatpush1.bf16.msra.mxu0 0
  %1395 = vmatprep.subr.bf16.mxu0 0
  %1396 = vmatpush1.bf16.msra.mxu0 0
  %1397 = vmatprep.subr.bf16.mxu0 0
  %1398 = vmatpush1.bf16.msra.mxu0 0
  %1399 = vmatprep.subr.bf16.mxu0 0
  %1400 = vmatpush1.bf16.msra.mxu0 0
  %1401 = vmatprep.subr.bf16.mxu0 0
  %1402 = vmatpush1.bf16.msra.mxu0 0
  %1403 = vmatprep.subr.bf16.mxu0 0
  %1404 = vmatpush1.bf16.msra.mxu0 0
  %1405 = vmatprep.mubr.bf16.mxu0 0
  %1406 = vmatmul.mubr.bf16.gmra.mrb[0].mxu0 %v1212
  %v1407 = vpop.f32.mrb[0].mxu0
  %v1408 = vadd.f32 0.0, %v1407
  %v1409 = vpop.f32.mrb[0].mxu0
  %v1410 = vadd.f32 0.0, %v1409
  %v1411 = vpop.f32.mrb[0].mxu0
  %v1412 = vadd.f32 0.0, %v1411
  %v1413 = vpop.f32.mrb[0].mxu0
  %v1414 = vadd.f32 0.0, %v1413
  %1415 = vdwg.mxu0
  %1416 = vmatprep.subr.bf16.mxu0 0
  %1417 = vmatpush1.bf16.msra.mxu0 %v1327
  %1418 = vmatprep.subr.bf16.mxu0 0
  %1419 = vmatpush1.bf16.msra.mxu0 %v1330
  %1420 = vmatprep.subr.bf16.mxu0 0
  %1421 = vmatpush1.bf16.msra.mxu0 %v1333
  %1422 = vmatprep.subr.bf16.mxu0 0
  %1423 = vmatpush1.bf16.msra.mxu0 %v1336
  %1424 = vmatprep.subr.bf16.mxu0 0
  %1425 = vmatpush1.bf16.msra.mxu0 %v1339
  %1426 = vmatprep.subr.bf16.mxu0 0
  %1427 = vmatpush1.bf16.msra.mxu0 %v1342
  %1428 = vmatprep.subr.bf16.mxu0 0
  %1429 = vmatpush1.bf16.msra.mxu0 %v1345
  %1430 = vmatprep.subr.bf16.mxu0 0
  %1431 = vmatpush1.bf16.msra.mxu0 %v1348
  %1432 = vmatprep.subr.bf16.mxu0 0
  %1433 = vmatpush1.bf16.msra.mxu0 0
  %1434 = vmatprep.subr.bf16.mxu0 0
  %1435 = vmatpush1.bf16.msra.mxu0 0
  %1436 = vmatprep.subr.bf16.mxu0 0
  %1437 = vmatpush1.bf16.msra.mxu0 0
  %1438 = vmatprep.subr.bf16.mxu0 0
  %1439 = vmatpush1.bf16.msra.mxu0 0
  %1440 = vmatprep.subr.bf16.mxu0 0
  %1441 = vmatpush1.bf16.msra.mxu0 0
  %1442 = vmatprep.subr.bf16.mxu0 0
  %1443 = vmatpush1.bf16.msra.mxu0 0
  %1444 = vmatprep.subr.bf16.mxu0 0
  %1445 = vmatpush1.bf16.msra.mxu0 0
  %1446 = vmatprep.subr.bf16.mxu0 0
  %1447 = vmatpush1.bf16.msra.mxu0 0
  %1448 = vmatprep.mubr.bf16.mxu0 0
  %1449 = vmatmul.mubr.bf16.gmra.mrb[0].mxu0 %v1212
  %v1450 = vpop.f32.mrb[0].mxu0
  %v1451 = vadd.f32 0.0, %v1450
  %v1452 = vpop.f32.mrb[0].mxu0
  %v1453 = vpop.f32.mrb[0].mxu0
  %v1454 = vadd.f32 0.0, %v1453
  %v1455 = vpop.f32.mrb[0].mxu0
  %1456 = vdwg.mxu0
  %v1457 = vpack.c.bf16 %v1412, %v1408
  %v1458 = vpack.c.bf16 %v1414, %v1410
  %v1459 = vpack.c.bf16 %v1454, %v1451
  %v1460 = vld [vmem:[%s3 + $0x60] sm:$0xf]
  %v1461 = vld [vmem:[%s3 + $0x68] sm:$0xf]
  %v1463 = vsel %vm83, %v1461, 0
  %1465 = vmatprep.subr.bf16.mxu0 0
  %1466 = vmatpush1.bf16.msra.mxu0 %v1458
  %1467 = vmatprep.subr.bf16.mxu0 0
  %1468 = vmatpush1.bf16.msra.mxu0 0
  %1469 = vmatprep.subr.bf16.mxu0 0
  %1470 = vmatpush1.bf16.msra.mxu0 0
  %1471 = vmatprep.subr.bf16.mxu0 0
  %1472 = vmatpush1.bf16.msra.mxu0 0
  %1473 = vmatprep.subr.bf16.mxu0 0
  %1474 = vmatpush1.bf16.msra.mxu0 0
  %1475 = vmatprep.subr.bf16.mxu0 0
  %1476 = vmatpush1.bf16.msra.mxu0 0
  %1477 = vmatprep.subr.bf16.mxu0 0
  %1478 = vmatpush1.bf16.msra.mxu0 0
  %1479 = vmatprep.subr.bf16.mxu0 0
  %1480 = vmatpush1.bf16.msra.mxu0 0
  %1481 = vmatprep.subr.bf16.mxu0 0
  %1482 = vmatpush1.bf16.msra.mxu0 0
  %1483 = vmatprep.subr.bf16.mxu0 0
  %1484 = vmatpush1.bf16.msra.mxu0 0
  %1485 = vmatprep.subr.bf16.mxu0 0
  %1486 = vmatpush1.bf16.msra.mxu0 0
  %1487 = vmatprep.subr.bf16.mxu0 0
  %1488 = vmatpush1.bf16.msra.mxu0 0
  %1489 = vmatprep.subr.bf16.mxu0 0
  %1490 = vmatpush1.bf16.msra.mxu0 0
  %1491 = vmatprep.subr.bf16.mxu0 0
  %1492 = vmatpush1.bf16.msra.mxu0 0
  %1493 = vmatprep.subr.bf16.mxu0 0
  %1494 = vmatpush1.bf16.msra.mxu0 0
  %1495 = vmatprep.subr.bf16.mxu0 0
  %1496 = vmatpush1.bf16.msra.mxu0 0
  %1497 = vmatprep.mubr.bf16.mxu0 0
  %1498 = vmatmul.mubr.bf16.gmra.mrb[0].mxu0 %v1463
  %v1499 = vpop.f32.mrb[0].mxu0
  %v1500 = vadd.f32 0.0, %v1499
  %v1501 = vpop.f32.mrb[0].mxu0
  %v1502 = vpop.f32.mrb[0].mxu0
  %v1503 = vpop.f32.mrb[0].mxu0
  %1504 = vdwg.mxu0
  %v1506 = vsel %vm83, %v1460, 0
  %1508 = vmatprep.subr.bf16.mxu0 0
  %1509 = vmatpush1.bf16.msra.mxu0 %v1457
  %1510 = vmatprep.subr.bf16.mxu0 0
  %1511 = vmatpush1.bf16.msra.mxu0 0
  %1512 = vmatprep.subr.bf16.mxu0 0
  %1513 = vmatpush1.bf16.msra.mxu0 0
  %1514 = vmatprep.subr.bf16.mxu0 0
  %1515 = vmatpush1.bf16.msra.mxu0 0
  %1516 = vmatprep.subr.bf16.mxu0 0
  %1517 = vmatpush1.bf16.msra.mxu0 0
  %1518 = vmatprep.subr.bf16.mxu0 0
  %1519 = vmatpush1.bf16.msra.mxu0 0
  %1520 = vmatprep.subr.bf16.mxu0 0
  %1521 = vmatpush1.bf16.msra.mxu0 0
  %1522 = vmatprep.subr.bf16.mxu0 0
  %1523 = vmatpush1.bf16.msra.mxu0 0
  %1524 = vmatprep.subr.bf16.mxu0 0
  %1525 = vmatpush1.bf16.msra.mxu0 0
  %1526 = vmatprep.subr.bf16.mxu0 0
  %1527 = vmatpush1.bf16.msra.mxu0 0
  %1528 = vmatprep.subr.bf16.mxu0 0
  %1529 = vmatpush1.bf16.msra.mxu0 0
  %1530 = vmatprep.subr.bf16.mxu0 0
  %1531 = vmatpush1.bf16.msra.mxu0 0
  %1532 = vmatprep.subr.bf16.mxu0 0
  %1533 = vmatpush1.bf16.msra.mxu0 0
  %1534 = vmatprep.subr.bf16.mxu0 0
  %1535 = vmatpush1.bf16.msra.mxu0 0
  %1536 = vmatprep.subr.bf16.mxu0 0
  %1537 = vmatpush1.bf16.msra.mxu0 0
  %1538 = vmatprep.subr.bf16.mxu0 0
  %1539 = vmatpush1.bf16.msra.mxu0 0
  %1540 = vmatprep.mubr.bf16.mxu0 0
  %1541 = vmatmul.mubr.bf16.gmra.mrb[0].mxu0 %v1506
  %v1542 = vpop.f32.mrb[0].mxu0
  %v1543 = vadd.f32 %v1500, %v1542
  %v1544 = vpop.f32.mrb[0].mxu0
  %v1545 = vpop.f32.mrb[0].mxu0
  %v1546 = vpop.f32.mrb[0].mxu0
  %1547 = vdwg.mxu0
  %v1548 = vld [vmem:[%s3 + $0x70] sm:$0xf]
  %v1550 = vsel %vm83, %v1548, 0
  %1552 = vmatprep.subr.bf16.mxu0 0
  %1553 = vmatpush1.bf16.msra.mxu0 %v1459
  %1554 = vmatprep.subr.bf16.mxu0 0
  %1555 = vmatpush1.bf16.msra.mxu0 0
  %1556 = vmatprep.subr.bf16.mxu0 0
  %1557 = vmatpush1.bf16.msra.mxu0 0
  %1558 = vmatprep.subr.bf16.mxu0 0
  %1559 = vmatpush1.bf16.msra.mxu0 0
  %1560 = vmatprep.subr.bf16.mxu0 0
  %1561 = vmatpush1.bf16.msra.mxu0 0
  %1562 = vmatprep.subr.bf16.mxu0 0
  %1563 = vmatpush1.bf16.msra.mxu0 0
  %1564 = vmatprep.subr.bf16.mxu0 0
  %1565 = vmatpush1.bf16.msra.mxu0 0
  %1566 = vmatprep.subr.bf16.mxu0 0
  %1567 = vmatpush1.bf16.msra.mxu0 0
  %1568 = vmatprep.subr.bf16.mxu0 0
  %1569 = vmatpush1.bf16.msra.mxu0 0
  %1570 = vmatprep.subr.bf16.mxu0 0
  %1571 = vmatpush1.bf16.msra.mxu0 0
  %1572 = vmatprep.subr.bf16.mxu0 0
  %1573 = vmatpush1.bf16.msra.mxu0 0
  %1574 = vmatprep.subr.bf16.mxu0 0
  %1575 = vmatpush1.bf16.msra.mxu0 0
  %1576 = vmatprep.subr.bf16.mxu0 0
  %1577 = vmatpush1.bf16.msra.mxu0 0
  %1578 = vmatprep.subr.bf16.mxu0 0
  %1579 = vmatpush1.bf16.msra.mxu0 0
  %1580 = vmatprep.subr.bf16.mxu0 0
  %1581 = vmatpush1.bf16.msra.mxu0 0
  %1582 = vmatprep.subr.bf16.mxu0 0
  %1583 = vmatpush1.bf16.msra.mxu0 0
  %1584 = vmatprep.mubr.bf16.mxu0 0
  %1585 = vmatmul.mubr.bf16.gmra.mrb[0].mxu0 %v1550
  %v1586 = vpop.f32.mrb[0].mxu0
  %v1587 = vadd.f32 0.0, %v1586
  %v1588 = vpop.f32.mrb[0].mxu0
  %v1589 = vpop.f32.mrb[0].mxu0
  %v1590 = vpop.f32.mrb[0].mxu0
  %1591 = vdwg.mxu0
  %v1592 = vadd.f32 %v1543, %v1587
  %v1593 = vld [vmem:[%s4 + $0x3] sm:$0x1]
  %v1594 = vlaneseq
  %v1595 = vshrl.u32 %v1594, 7
  %v1596 = vsub.s32 0, %v1595
  %v1597 = vrot.slane %v1593, %v1596
  %v1598 = vadd.f32 %v1592, %v1597
  %vm1599 = vcmp.ge.f32.partialorder %v1598, 0.0
  %v1600 = vmul.f32 %v1598, 0.2
  %v1601 = vsel %vm1599, %v1598, %v1600
  %1602 = vst [vmem:[%s5 + $0x10] sm:$0xff] %v1601
  %v1603 = vld [vmem:[%s3 + $0x78] sm:$0xf]
  %v1604 = vld [vmem:[%s3 + $0x80] sm:$0xf]
  %v1606 = vsel %vm387, %v1604, 0
  %1608 = vmatprep.subr.bf16.mxu0 0
  %1609 = vmatpush1.bf16.msra.mxu0 %v358
  %1610 = vmatprep.subr.bf16.mxu0 0
  %1611 = vmatpush1.bf16.msra.mxu0 %v367
  %1612 = vmatprep.subr.bf16.mxu0 0
  %1613 = vmatpush1.bf16.msra.mxu0 0
  %1614 = vmatprep.subr.bf16.mxu0 0
  %1615 = vmatpush1.bf16.msra.mxu0 0
  %1616 = vmatprep.subr.bf16.mxu0 0
  %1617 = vmatpush1.bf16.msra.mxu0 0
  %1618 = vmatprep.subr.bf16.mxu0 0
  %1619 = vmatpush1.bf16.msra.mxu0 0
  %1620 = vmatprep.subr.bf16.mxu0 0
  %1621 = vmatpush1.bf16.msra.mxu0 0
  %1622 = vmatprep.subr.bf16.mxu0 0
  %1623 = vmatpush1.bf16.msra.mxu0 0
  %1624 = vmatprep.subr.bf16.mxu0 0
  %1625 = vmatpush1.bf16.msra.mxu0 0
  %1626 = vmatprep.subr.bf16.mxu0 0
  %1627 = vmatpush1.bf16.msra.mxu0 0
  %1628 = vmatprep.subr.bf16.mxu0 0
  %1629 = vmatpush1.bf16.msra.mxu0 0
  %1630 = vmatprep.subr.bf16.mxu0 0
  %1631 = vmatpush1.bf16.msra.mxu0 0
  %1632 = vmatprep.subr.bf16.mxu0 0
  %1633 = vmatpush1.bf16.msra.mxu0 0
  %1634 = vmatprep.subr.bf16.mxu0 0
  %1635 = vmatpush1.bf16.msra.mxu0 0
  %1636 = vmatprep.subr.bf16.mxu0 0
  %1637 = vmatpush1.bf16.msra.mxu0 0
  %1638 = vmatprep.subr.bf16.mxu0 0
  %1639 = vmatpush1.bf16.msra.mxu0 0
  %1640 = vmatprep.mubr.bf16.mxu0 0
  %1641 = vmatmul.mubr.bf16.gmra.mrb[0].mxu0 %v1606
  %v1642 = vpop.f32.mrb[0].mxu0
  %v1643 = vadd.f32 0.0, %v1642
  %v1644 = vpop.f32.mrb[0].mxu0
  %v1645 = vpop.f32.mrb[0].mxu0
  %v1646 = vpop.f32.mrb[0].mxu0
  %1647 = vdwg.mxu0
  %v1649 = vsel %vm387, %v1603, 0
  %1651 = vmatprep.subr.bf16.mxu0 0
  %1652 = vmatpush1.bf16.msra.mxu0 %v357
  %1653 = vmatprep.subr.bf16.mxu0 0
  %1654 = vmatpush1.bf16.msra.mxu0 %v366
  %1655 = vmatprep.subr.bf16.mxu0 0
  %1656 = vmatpush1.bf16.msra.mxu0 0
  %1657 = vmatprep.subr.bf16.mxu0 0
  %1658 = vmatpush1.bf16.msra.mxu0 0
  %1659 = vmatprep.subr.bf16.mxu0 0
  %1660 = vmatpush1.bf16.msra.mxu0 0
  %1661 = vmatprep.subr.bf16.mxu0 0
  %1662 = vmatpush1.bf16.msra.mxu0 0
  %1663 = vmatprep.subr.bf16.mxu0 0
  %1664 = vmatpush1.bf16.msra.mxu0 0
  %1665 = vmatprep.subr.bf16.mxu0 0
  %1666 = vmatpush1.bf16.msra.mxu0 0
  %1667 = vmatprep.subr.bf16.mxu0 0
  %1668 = vmatpush1.bf16.msra.mxu0 0
  %1669 = vmatprep.subr.bf16.mxu0 0
  %1670 = vmatpush1.bf16.msra.mxu0 0
  %1671 = vmatprep.subr.bf16.mxu0 0
  %1672 = vmatpush1.bf16.msra.mxu0 0
  %1673 = vmatprep.subr.bf16.mxu0 0
  %1674 = vmatpush1.bf16.msra.mxu0 0
  %1675 = vmatprep.subr.bf16.mxu0 0
  %1676 = vmatpush1.bf16.msra.mxu0 0
  %1677 = vmatprep.subr.bf16.mxu0 0
  %1678 = vmatpush1.bf16.msra.mxu0 0
  %1679 = vmatprep.subr.bf16.mxu0 0
  %1680 = vmatpush1.bf16.msra.mxu0 0
  %1681 = vmatprep.subr.bf16.mxu0 0
  %1682 = vmatpush1.bf16.msra.mxu0 0
  %1683 = vmatprep.mubr.bf16.mxu0 0
  %1684 = vmatmul.mubr.bf16.gmra.mrb[0].mxu0 %v1649
  %v1685 = vpop.f32.mrb[0].mxu0
  %v1686 = vadd.f32 %v1643, %v1685
  %v1687 = vpop.f32.mrb[0].mxu0
  %v1688 = vpop.f32.mrb[0].mxu0
  %v1689 = vpop.f32.mrb[0].mxu0
  %1690 = vdwg.mxu0
  %v1691 = vld [vmem:[%s3 + $0x88] sm:$0xf]
  %v1693 = vsel %vm387, %v1691, 0
  %1695 = vmatprep.subr.bf16.mxu0 0
  %1696 = vmatpush1.bf16.msra.mxu0 %v359
  %1697 = vmatprep.subr.bf16.mxu0 0
  %1698 = vmatpush1.bf16.msra.mxu0 %v368
  %1699 = vmatprep.subr.bf16.mxu0 0
  %1700 = vmatpush1.bf16.msra.mxu0 0
  %1701 = vmatprep.subr.bf16.mxu0 0
  %1702 = vmatpush1.bf16.msra.mxu0 0
  %1703 = vmatprep.subr.bf16.mxu0 0
  %1704 = vmatpush1.bf16.msra.mxu0 0
  %1705 = vmatprep.subr.bf16.mxu0 0
  %1706 = vmatpush1.bf16.msra.mxu0 0
  %1707 = vmatprep.subr.bf16.mxu0 0
  %1708 = vmatpush1.bf16.msra.mxu0 0
  %1709 = vmatprep.subr.bf16.mxu0 0
  %1710 = vmatpush1.bf16.msra.mxu0 0
  %1711 = vmatprep.subr.bf16.mxu0 0
  %1712 = vmatpush1.bf16.msra.mxu0 0
  %1713 = vmatprep.subr.bf16.mxu0 0
  %1714 = vmatpush1.bf16.msra.mxu0 0
  %1715 = vmatprep.subr.bf16.mxu0 0
  %1716 = vmatpush1.bf16.msra.mxu0 0
  %1717 = vmatprep.subr.bf16.mxu0 0
  %1718 = vmatpush1.bf16.msra.mxu0 0
  %1719 = vmatprep.subr.bf16.mxu0 0
  %1720 = vmatpush1.bf16.msra.mxu0 0
  %1721 = vmatprep.subr.bf16.mxu0 0
  %1722 = vmatpush1.bf16.msra.mxu0 0
  %1723 = vmatprep.subr.bf16.mxu0 0
  %1724 = vmatpush1.bf16.msra.mxu0 0
  %1725 = vmatprep.subr.bf16.mxu0 0
  %1726 = vmatpush1.bf16.msra.mxu0 0
  %1727 = vmatprep.mubr.bf16.mxu0 0
  %1728 = vmatmul.mubr.bf16.gmra.mrb[0].mxu0 %v1693
  %v1729 = vpop.f32.mrb[0].mxu0
  %v1730 = vadd.f32 0.0, %v1729
  %v1731 = vpop.f32.mrb[0].mxu0
  %v1732 = vpop.f32.mrb[0].mxu0
  %v1733 = vpop.f32.mrb[0].mxu0
  %1734 = vdwg.mxu0
  %v1735 = vadd.f32 %v1686, %v1730
  %v1736 = vld [vmem:[%s4 + $0x4] sm:$0x1]
  %v1737 = vlaneseq
  %v1738 = vshrl.u32 %v1737, 7
  %v1739 = vsub.s32 0, %v1738
  %v1740 = vrot.slane %v1736, %v1739
  %v1741 = vadd.f32 %v1735, %v1740
  %vm1742 = vcmp.ge.f32.partialorder %v1741, 0.0
  %v1743 = vmul.f32 %v1741, 0.2
  %v1744 = vsel %vm1742, %v1741, %v1743
  %v1745 = vadd.f32 %v1744, %v1601
  %v1746 = vpack.c.bf16 %v1745, %v1745
  %v1747 = vld [vmem:[%s2 + $0x180] sm:$0xff]
  %v1748 = vld [vmem:[%s2 + $0x188] sm:$0xf]
  %v1749 = vld [vmem:[%s2 + $0x18c] sm:$0xff]
  %v1750 = vld [vmem:[%s2 + $0x194] sm:$0xf]
  %v1751 = vld [vmem:[%s2 + $0x198] sm:$0xff]
  %v1752 = vld [vmem:[%s2 + $0x1a0] sm:$0xf]
  %v1753 = vld [vmem:[%s2 + $0x1a4] sm:$0xff]
  %v1754 = vld [vmem:[%s2 + $0x1ac] sm:$0xf]
  %v1755 = vld [vmem:[%s2 + $0x1b0] sm:$0xff]
  %v1756 = vld [vmem:[%s2 + $0x1b8] sm:$0xf]
  %v1757 = vld [vmem:[%s2 + $0x1bc] sm:$0xff]
  %v1758 = vld [vmem:[%s2 + $0x1c4] sm:$0xf]
  %v1759 = vld [vmem:[%s2 + $0x1c8] sm:$0xff]
  %v1760 = vld [vmem:[%s2 + $0x1d0] sm:$0xf]
  %v1761 = vld [vmem:[%s2 + $0x1d4] sm:$0xff]
  %v1762 = vld [vmem:[%s2 + $0x1dc] sm:$0xf]
  %v1763 = vld [vmem:[%s2 + $0x1e0] sm:$0xff]
  %v1764 = vld [vmem:[%s2 + $0x1e8] sm:$0xf]
  %v1765 = vld [vmem:[%s2 + $0x1ec] sm:$0xff]
  %v1766 = vld [vmem:[%s2 + $0x1f4] sm:$0xf]
  %v1767 = vld [vmem:[%s2 + $0x1f8] sm:$0xff]
  %v1768 = vld [vmem:[%s2 + $0x200] sm:$0xf]
  %v1769 = vld [vmem:[%s2 + $0x204] sm:$0xff]
  %v1770 = vld [vmem:[%s2 + $0x20c] sm:$0xf]
  %v1771 = vld [vmem:[%s2 + $0x210] sm:$0xff]
  %v1772 = vld [vmem:[%s2 + $0x218] sm:$0xf]
  %v1773 = vld [vmem:[%s2 + $0x21c] sm:$0xff]
  %v1774 = vld [vmem:[%s2 + $0x224] sm:$0xf]
  %v1775 = vld [vmem:[%s2 + $0x228] sm:$0xff]
  %v1776 = vld [vmem:[%s2 + $0x230] sm:$0xf]
  %v1777 = vld [vmem:[%s2 + $0x234] sm:$0xff]
  %v1778 = vld [vmem:[%s2 + $0x23c] sm:$0xf]
  %v1811 = vunpack.c.l.b16 %v1747
  %v1812 = vunpack.c.h.b16 %v1747
  %v1813 = vunpack.c.l.b16 %v1748
  %v1814 = vunpack.c.l.b16 %v1749
  %v1815 = vunpack.c.h.b16 %v1749
  %v1816 = vunpack.c.l.b16 %v1750
  %v1817 = vunpack.c.l.b16 %v1751
  %v1818 = vunpack.c.h.b16 %v1751
  %v1819 = vunpack.c.l.b16 %v1752
  %v1820 = vunpack.c.l.b16 %v1753
  %v1821 = vunpack.c.h.b16 %v1753
  %v1822 = vunpack.c.l.b16 %v1754
  %v1823 = vunpack.c.l.b16 %v1755
  %v1824 = vunpack.c.h.b16 %v1755
  %v1825 = vunpack.c.l.b16 %v1756
  %v1826 = vunpack.c.l.b16 %v1757
  %v1827 = vunpack.c.h.b16 %v1757
  %v1828 = vunpack.c.l.b16 %v1758
  %v1829 = vunpack.c.l.b16 %v1759
  %v1830 = vunpack.c.h.b16 %v1759
  %v1831 = vunpack.c.l.b16 %v1760
  %v1832 = vunpack.c.l.b16 %v1761
  %v1833 = vunpack.c.h.b16 %v1761
  %v1834 = vunpack.c.l.b16 %v1762
  %v1835 = vunpack.c.l.b16 %v1763
  %v1836 = vunpack.c.h.b16 %v1763
  %v1837 = vunpack.c.l.b16 %v1764
  %v1838 = vunpack.c.l.b16 %v1765
  %v1839 = vunpack.c.h.b16 %v1765
  %v1840 = vunpack.c.l.b16 %v1766
  %v1841 = vunpack.c.l.b16 %v1767
  %v1842 = vunpack.c.h.b16 %v1767
  %v1843 = vunpack.c.l.b16 %v1768
  %v1844 = vunpack.c.l.b16 %v1769
  %v1845 = vunpack.c.h.b16 %v1769
  %v1846 = vunpack.c.l.b16 %v1770
  %v1847 = vunpack.c.l.b16 %v1771
  %v1848 = vunpack.c.h.b16 %v1771
  %v1849 = vunpack.c.l.b16 %v1772
  %v1850 = vunpack.c.l.b16 %v1773
  %v1851 = vunpack.c.h.b16 %v1773
  %v1852 = vunpack.c.l.b16 %v1774
  %v1853 = vunpack.c.l.b16 %v1775
  %v1854 = vunpack.c.h.b16 %v1775
  %v1855 = vunpack.c.l.b16 %v1776
  %v1856 = vunpack.c.l.b16 %v1777
  %v1857 = vunpack.c.h.b16 %v1777
  %v1858 = vunpack.c.l.b16 %v1778
  %v1859 = vpack.c.b16 %v1814, %v1811
  %v1860 = vpack.c.b16 %v1815, %v1812
  %v1861 = vpack.c.b16 %v1816, %v1813
  %v1862 = vpack.c.b16 %v1820, %v1817
  %v1863 = vpack.c.b16 %v1821, %v1818
  %v1864 = vpack.c.b16 %v1822, %v1819
  %v1865 = vpack.c.b16 %v1826, %v1823
  %v1866 = vpack.c.b16 %v1827, %v1824
  %v1867 = vpack.c.b16 %v1828, %v1825
  %v1868 = vpack.c.b16 %v1832, %v1829
  %v1869 = vpack.c.b16 %v1833, %v1830
  %v1870 = vpack.c.b16 %v1834, %v1831
  %v1871 = vpack.c.b16 %v1838, %v1835
  %v1872 = vpack.c.b16 %v1839, %v1836
  %v1873 = vpack.c.b16 %v1840, %v1837
  %v1874 = vpack.c.b16 %v1844, %v1841
  %v1875 = vpack.c.b16 %v1845, %v1842
  %v1876 = vpack.c.b16 %v1846, %v1843
  %v1877 = vpack.c.b16 %v1850, %v1847
  %v1878 = vpack.c.b16 %v1851, %v1848
  %v1879 = vpack.c.b16 %v1852, %v1849
  %v1880 = vpack.c.b16 %v1856, %v1853
  %v1881 = vpack.c.b16 %v1857, %v1854
  %v1882 = vpack.c.b16 %v1858, %v1855
  %1907 = vmatprep.subr.bf16.mxu0 %v1860
  %1908 = vmatpush1.bf16.msra.mxu0 %v1859
  %1909 = vmatprep.subr.bf16.mxu0 %v1863
  %1910 = vmatpush1.bf16.msra.mxu0 %v1862
  %1911 = vmatprep.subr.bf16.mxu0 %v1866
  %1912 = vmatpush1.bf16.msra.mxu0 %v1865
  %1913 = vmatprep.subr.bf16.mxu0 %v1869
  %1914 = vmatpush1.bf16.msra.mxu0 %v1868
  %1915 = vmatprep.subr.bf16.mxu0 %v1872
  %1916 = vmatpush1.bf16.msra.mxu0 %v1871
  %1917 = vmatprep.subr.bf16.mxu0 %v1875
  %1918 = vmatpush1.bf16.msra.mxu0 %v1874
  %1919 = vmatprep.subr.bf16.mxu0 %v1878
  %1920 = vmatpush1.bf16.msra.mxu0 %v1877
  %1921 = vmatprep.subr.bf16.mxu0 %v1881
  %1922 = vmatpush1.bf16.msra.mxu0 %v1880
  %1923 = vmatprep.subr.bf16.mxu0 0
  %1924 = vmatpush1.bf16.msra.mxu0 0
  %1925 = vmatprep.subr.bf16.mxu0 0
  %1926 = vmatpush1.bf16.msra.mxu0 0
  %1927 = vmatprep.subr.bf16.mxu0 0
  %1928 = vmatpush1.bf16.msra.mxu0 0
  %1929 = vmatprep.subr.bf16.mxu0 0
  %1930 = vmatpush1.bf16.msra.mxu0 0
  %1931 = vmatprep.subr.bf16.mxu0 0
  %1932 = vmatpush1.bf16.msra.mxu0 0
  %1933 = vmatprep.subr.bf16.mxu0 0
  %1934 = vmatpush1.bf16.msra.mxu0 0
  %1935 = vmatprep.subr.bf16.mxu0 0
  %1936 = vmatpush1.bf16.msra.mxu0 0
  %1937 = vmatprep.subr.bf16.mxu0 0
  %1938 = vmatpush1.bf16.msra.mxu0 0
  %1939 = vmatprep.mubr.bf16.mxu0 0
  %1940 = vmatmul.mubr.bf16.gmra.mrb[0].mxu0 %v1746
  %v1941 = vpop.f32.mrb[0].mxu0
  %v1942 = vadd.f32 0.0, %v1941
  %v1943 = vpop.f32.mrb[0].mxu0
  %v1944 = vadd.f32 0.0, %v1943
  %v1945 = vpop.f32.mrb[0].mxu0
  %v1946 = vpop.f32.mrb[0].mxu0
  %1947 = vdwg.mxu0
  %1948 = vmatprep.subr.bf16.mxu0 0
  %1949 = vmatpush1.bf16.msra.mxu0 %v1861
  %1950 = vmatprep.subr.bf16.mxu0 0
  %1951 = vmatpush1.bf16.msra.mxu0 %v1864
  %1952 = vmatprep.subr.bf16.mxu0 0
  %1953 = vmatpush1.bf16.msra.mxu0 %v1867
  %1954 = vmatprep.subr.bf16.mxu0 0
  %1955 = vmatpush1.bf16.msra.mxu0 %v1870
  %1956 = vmatprep.subr.bf16.mxu0 0
  %1957 = vmatpush1.bf16.msra.mxu0 %v1873
  %1958 = vmatprep.subr.bf16.mxu0 0
  %1959 = vmatpush1.bf16.msra.mxu0 %v1876
  %1960 = vmatprep.subr.bf16.mxu0 0
  %1961 = vmatpush1.bf16.msra.mxu0 %v1879
  %1962 = vmatprep.subr.bf16.mxu0 0
  %1963 = vmatpush1.bf16.msra.mxu0 %v1882
  %1964 = vmatprep.subr.bf16.mxu0 0
  %1965 = vmatpush1.bf16.msra.mxu0 0
  %1966 = vmatprep.subr.bf16.mxu0 0
  %1967 = vmatpush1.bf16.msra.mxu0 0
  %1968 = vmatprep.subr.bf16.mxu0 0
  %1969 = vmatpush1.bf16.msra.mxu0 0
  %1970 = vmatprep.subr.bf16.mxu0 0
  %1971 = vmatpush1.bf16.msra.mxu0 0
  %1972 = vmatprep.subr.bf16.mxu0 0
  %1973 = vmatpush1.bf16.msra.mxu0 0
  %1974 = vmatprep.subr.bf16.mxu0 0
  %1975 = vmatpush1.bf16.msra.mxu0 0
  %1976 = vmatprep.subr.bf16.mxu0 0
  %1977 = vmatpush1.bf16.msra.mxu0 0
  %1978 = vmatprep.subr.bf16.mxu0 0
  %1979 = vmatpush1.bf16.msra.mxu0 0
  %1980 = vmatprep.mubr.bf16.mxu0 0
  %1981 = vmatmul.mubr.bf16.gmra.mrb[0].mxu0 %v1746
  %v1982 = vpop.f32.mrb[0].mxu0
  %v1983 = vadd.f32 0.0, %v1982
  %v1984 = vpop.f32.mrb[0].mxu0
  %v1985 = vpop.f32.mrb[0].mxu0
  %v1986 = vpop.f32.mrb[0].mxu0
  %1987 = vdwg.mxu0
  %v1988 = vpack.c.bf16 %v1942, %v1942
  %v1989 = vpack.c.bf16 %v1944, %v1944
  %v1990 = vpack.c.bf16 %v1983, %v1983
  %v1991 = vld [vmem:[%s3 + $0x90] sm:$0x3]
  %v1992 = vld [vmem:[%s3 + $0x98] sm:$0x3]
  %vm1993 = vcmask 64512
  %v1995 = vsel %vm1993, %v1992, 0
  %vm1997 = vcmask 1043456
  %v1999 = vsel %vm1997, %v1989, 0
  %2001 = vmatprep.subr.bf16.mxu0 0
  %2002 = vmatpush1.bf16.msra.mxu0 %v1999
  %2003 = vmatprep.subr.bf16.mxu0 0
  %2004 = vmatpush1.bf16.msra.mxu0 0
  %2005 = vmatprep.subr.bf16.mxu0 0
  %2006 = vmatpush1.bf16.msra.mxu0 0
  %2007 = vmatprep.subr.bf16.mxu0 0
  %2008 = vmatpush1.bf16.msra.mxu0 0
  %2009 = vmatprep.subr.bf16.mxu0 0
  %2010 = vmatpush1.bf16.msra.mxu0 0
  %2011 = vmatprep.subr.bf16.mxu0 0
  %2012 = vmatpush1.bf16.msra.mxu0 0
  %2013 = vmatprep.subr.bf16.mxu0 0
  %2014 = vmatpush1.bf16.msra.mxu0 0
  %2015 = vmatprep.subr.bf16.mxu0 0
  %2016 = vmatpush1.bf16.msra.mxu0 0
  %2017 = vmatprep.subr.bf16.mxu0 0
  %2018 = vmatpush1.bf16.msra.mxu0 0
  %2019 = vmatprep.subr.bf16.mxu0 0
  %2020 = vmatpush1.bf16.msra.mxu0 0
  %2021 = vmatprep.subr.bf16.mxu0 0
  %2022 = vmatpush1.bf16.msra.mxu0 0
  %2023 = vmatprep.subr.bf16.mxu0 0
  %2024 = vmatpush1.bf16.msra.mxu0 0
  %2025 = vmatprep.subr.bf16.mxu0 0
  %2026 = vmatpush1.bf16.msra.mxu0 0
  %2027 = vmatprep.subr.bf16.mxu0 0
  %2028 = vmatpush1.bf16.msra.mxu0 0
  %2029 = vmatprep.subr.bf16.mxu0 0
  %2030 = vmatpush1.bf16.msra.mxu0 0
  %2031 = vmatprep.subr.bf16.mxu0 0
  %2032 = vmatpush1.bf16.msra.mxu0 0
  %2033 = vmatprep.mubr.bf16.mxu0 0
  %2034 = vmatmul.mubr.bf16.gmra.mrb[0].mxu0 %v1995
  %v2035 = vpop.f32.mrb[0].mxu0
  %v2036 = vadd.f32 0.0, %v2035
  %v2037 = vpop.f32.mrb[0].mxu0
  %v2038 = vpop.f32.mrb[0].mxu0
  %v2039 = vpop.f32.mrb[0].mxu0
  %2040 = vdwg.mxu0
  %v2042 = vsel %vm1993, %v1991, 0
  %v2045 = vsel %vm1997, %v1988, 0
  %2047 = vmatprep.subr.bf16.mxu0 0
  %2048 = vmatpush1.bf16.msra.mxu0 %v2045
  %2049 = vmatprep.subr.bf16.mxu0 0
  %2050 = vmatpush1.bf16.msra.mxu0 0
  %2051 = vmatprep.subr.bf16.mxu0 0
  %2052 = vmatpush1.bf16.msra.mxu0 0
  %2053 = vmatprep.subr.bf16.mxu0 0
  %2054 = vmatpush1.bf16.msra.mxu0 0
  %2055 = vmatprep.subr.bf16.mxu0 0
  %2056 = vmatpush1.bf16.msra.mxu0 0
  %2057 = vmatprep.subr.bf16.mxu0 0
  %2058 = vmatpush1.bf16.msra.mxu0 0
  %2059 = vmatprep.subr.bf16.mxu0 0
  %2060 = vmatpush1.bf16.msra.mxu0 0
  %2061 = vmatprep.subr.bf16.mxu0 0
  %2062 = vmatpush1.bf16.msra.mxu0 0
  %2063 = vmatprep.subr.bf16.mxu0 0
  %2064 = vmatpush1.bf16.msra.mxu0 0
  %2065 = vmatprep.subr.bf16.mxu0 0
  %2066 = vmatpush1.bf16.msra.mxu0 0
  %2067 = vmatprep.subr.bf16.mxu0 0
  %2068 = vmatpush1.bf16.msra.mxu0 0
  %2069 = vmatprep.subr.bf16.mxu0 0
  %2070 = vmatpush1.bf16.msra.mxu0 0
  %2071 = vmatprep.subr.bf16.mxu0 0
  %2072 = vmatpush1.bf16.msra.mxu0 0
  %2073 = vmatprep.subr.bf16.mxu0 0
  %2074 = vmatpush1.bf16.msra.mxu0 0
  %2075 = vmatprep.subr.bf16.mxu0 0
  %2076 = vmatpush1.bf16.msra.mxu0 0
  %2077 = vmatprep.subr.bf16.mxu0 0
  %2078 = vmatpush1.bf16.msra.mxu0 0
  %2079 = vmatprep.mubr.bf16.mxu0 0
  %2080 = vmatmul.mubr.bf16.gmra.mrb[0].mxu0 %v2042
  %v2081 = vpop.f32.mrb[0].mxu0
  %v2082 = vadd.f32 %v2036, %v2081
  %v2083 = vpop.f32.mrb[0].mxu0
  %v2084 = vpop.f32.mrb[0].mxu0
  %v2085 = vpop.f32.mrb[0].mxu0
  %2086 = vdwg.mxu0
  %v2087 = vld [vmem:[%s3 + $0xa0] sm:$0x3]
  %v2089 = vsel %vm1993, %v2087, 0
  %v2092 = vsel %vm1997, %v1990, 0
  %2094 = vmatprep.subr.bf16.mxu0 0
  %2095 = vmatpush1.bf16.msra.mxu0 %v2092
  %2096 = vmatprep.subr.bf16.mxu0 0
  %2097 = vmatpush1.bf16.msra.mxu0 0
  %2098 = vmatprep.subr.bf16.mxu0 0
  %2099 = vmatpush1.bf16.msra.mxu0 0
  %2100 = vmatprep.subr.bf16.mxu0 0
  %2101 = vmatpush1.bf16.msra.mxu0 0
  %2102 = vmatprep.subr.bf16.mxu0 0
  %2103 = vmatpush1.bf16.msra.mxu0 0
  %2104 = vmatprep.subr.bf16.mxu0 0
  %2105 = vmatpush1.bf16.msra.mxu0 0
  %2106 = vmatprep.subr.bf16.mxu0 0
  %2107 = vmatpush1.bf16.msra.mxu0 0
  %2108 = vmatprep.subr.bf16.mxu0 0
  %2109 = vmatpush1.bf16.msra.mxu0 0
  %2110 = vmatprep.subr.bf16.mxu0 0
  %2111 = vmatpush1.bf16.msra.mxu0 0
  %2112 = vmatprep.subr.bf16.mxu0 0
  %2113 = vmatpush1.bf16.msra.mxu0 0
  %2114 = vmatprep.subr.bf16.mxu0 0
  %2115 = vmatpush1.bf16.msra.mxu0 0
  %2116 = vmatprep.subr.bf16.mxu0 0
  %2117 = vmatpush1.bf16.msra.mxu0 0
  %2118 = vmatprep.subr.bf16.mxu0 0
  %2119 = vmatpush1.bf16.msra.mxu0 0
  %2120 = vmatprep.subr.bf16.mxu0 0
  %2121 = vmatpush1.bf16.msra.mxu0 0
  %2122 = vmatprep.subr.bf16.mxu0 0
  %2123 = vmatpush1.bf16.msra.mxu0 0
  %2124 = vmatprep.subr.bf16.mxu0 0
  %2125 = vmatpush1.bf16.msra.mxu0 0
  %2126 = vmatprep.mubr.bf16.mxu0 0
  %2127 = vmatmul.mubr.bf16.gmra.mrb[0].mxu0 %v2089
  %v2128 = vpop.f32.mrb[0].mxu0
  %v2129 = vadd.f32 0.0, %v2128
  %v2130 = vpop.f32.mrb[0].mxu0
  %v2131 = vpop.f32.mrb[0].mxu0
  %v2132 = vpop.f32.mrb[0].mxu0
  %2133 = vdwg.mxu0
  %v2134 = vadd.f32 %v2082, %v2129
  %v2135 = vld [vmem:[%s4 + $0x5] sm:$0x1]
  %v2136 = vlaneseq
  %v2137 = vshrl.u32 %v2136, 7
  %v2138 = vsub.s32 0, %v2137
  %v2139 = vrot.slane %v2135, %v2138
  %v2140 = vadd.f32 %v2134, %v2139
  %vm2141 = vcmp.ge.f32.partialorder %v2140, 0.0
  %v2142 = vmul.f32 %v2140, 0.2
  %v2143 = vsel %vm2141, %v2140, %v2142
  %2144 = vst [vmem:[%s5 + $0x18] sm:$0xf] %v2143
  // Predicated region
  $region22: #{_lambda_.1} parent=0 // pred_check
    _
  $region23: #{_lambda_.1} parent=0 // pred_check_branch
    %2146 = sbr.rel (0) target = $region25
  $region24: #{_lambda_.1} parent=0 // pred_region
    _
  $region25: #{_lambda_.1} parent=0 // pred_fallthru
    _
  // Predicated region
  $region26: #{_lambda_.1} parent=0 // pred_check
    _
  $region27: #{_lambda_.1} parent=0 // pred_check_branch
    %2148 = sbr.rel (0) target = $region29
  $region28: #{_lambda_.1} parent=0 // pred_region
    _
  $region29: #{_lambda_.1} parent=0 // pred_fallthru
    _

</llo_original>
